<compile_context>
chip_gen: v5e
topology: v5e:2x2
jax: 0.10.0
libtpu: 0.0.40
codegen_flags: <defaults>
</compile_context>

<pallas_src>
import jax
import jax.numpy as jnp
import numpy as np
from jax.experimental import pallas as pl
from jax.experimental.pallas import tpu as pltpu

WIDTH_IN = 16          # widthInputSide
NUM_NEW_FEATURES = 24  # numNewfeatures
WIDTHS_OUT = [128, 64, 32]


def net_kernel(pts_ref, feats_ref,
               w1bd, b1t, w2bd, b2t, w3bd, b3t,
               wo0gp, wo0f, bo0, wo1, bo1, wo2, bo2, wo3, bo3,
               out_ref):
    """One batch tile: activations are (features, B_TILE); batch stays lane-dense throughout."""

    def mm(w_ref, x):
        # MXU matmul: weights are stored in their MXU dtype (bf16 except the tiny last layer);
        # activations are cast only at the dot input, accumulation and elementwise stay f32.
        w = w_ref[...]
        return jnp.dot(w, x.astype(w.dtype), preferred_element_type=jnp.float32)

    pts = pts_ref[...]          # (P, Bt)  f32
    feats = feats_ref[...]      # (24, Bt) f32

    # ---- input side: 3x (Linear + ReLU) per point, as block-diagonal matmuls on the stacked slab.
    h = jnp.maximum(mm(w1bd, pts) + b1t[...], 0.0)     # Linear(1->16) per point -> (P*16, Bt)
    h = jnp.maximum(mm(w2bd, h) + b2t[...], 0.0)       # block-diag Linear(16->16)
    h = jnp.maximum(mm(w3bd, h) + b3t[...], 0.0)       # block-diag Linear(16->16)

    # ---- mean-pool over points (folded into wo0gp = (1/P)*tile(wo0g)), dropout = identity (eval),
    #      concat(new_features) handled as a split matmul (no lane/sublane concat in VMEM).
    z = mm(wo0gp, h) + mm(wo0f, feats) + bo0[...]      # oLayer0 -> (128, Bt)
    z = jnp.maximum(z, 0.0)
    z = jnp.maximum(mm(wo1, z) + bo1[...], 0.0)        # (64, Bt)
    z = jnp.maximum(mm(wo2, z) + bo2[...], 0.0)        # (32, Bt)
    z = mm(wo3, z) + bo3[...]                          # (1, Bt)  (wo3 kept f32, tiny matmul)
    out_ref[...] = jax.nn.sigmoid(z)                   # lane-dense (1, Bt) store


def _round_up(x, m):
    return ((x + m - 1) // m) * m


def net_forward(points, added_features, kparams, *, b_tile=None):
    """points: (B, P) f32, added_features: (B, 24) f32, kparams from prepare_params -> (B,) f32."""
    B, P = points.shape
    assert kparams[0].shape == (P * WIDTH_IN, P), "kparams were prepared for a different P"

    if b_tile is None:
        # Lane-dense tile: multiple of 128, up to 2048 (per-step working set is a few MiB).
        b_tile = max(128, min(2048, _round_up(B, 128)))
        # Keep >= 2 grid steps for large batches so v7x megacore has parallel work.
        if B > 256 and b_tile >= B:
            b_tile = max(128, _round_up((B + 1) // 2, 128))
    b_pad = _round_up(B, b_tile)
    grid = (b_pad // b_tile,)

    # Transpose so batch sits on the lane axis; zero-pad batch to the tile boundary
    # (padded columns compute harmless finite garbage and are sliced off).
    pts_t = jnp.pad(jnp.transpose(points).astype(jnp.float32), ((0, 0), (0, b_pad - B)))
    feats_t = jnp.pad(jnp.transpose(added_features).astype(jnp.float32), ((0, 0), (0, b_pad - B)))

    batch_spec = lambda i: (0, i)     # noqa: E731
    resident = lambda i: (0, 0)       # noqa: E731  (weights stay VMEM-resident)

    in_specs = [
        pl.BlockSpec((P, b_tile), batch_spec),
        pl.BlockSpec((NUM_NEW_FEATURES, b_tile), batch_spec),
    ] + [pl.BlockSpec(p.shape, resident) for p in kparams]

    # Advisory cost estimate (counts the block-diagonal zeros — that is what the MXU executes).
    flops_per_col = 2 * (P * WIDTH_IN * P                       # layer 1 block-diag
                         + 2 * (P * WIDTH_IN) ** 2              # layers 2,3 block-diag
                         + WIDTHS_OUT[0] * (P * WIDTH_IN)       # oLayer0 pooled path
                         + WIDTHS_OUT[0] * NUM_NEW_FEATURES     # oLayer0 feature path
                         + WIDTHS_OUT[0] * WIDTHS_OUT[1]
                         + WIDTHS_OUT[1] * WIDTHS_OUT[2]
                         + WIDTHS_OUT[2])
    weight_bytes = int(sum(int(np.prod(p.shape)) * p.dtype.itemsize for p in kparams))
    cost = pl.CostEstimate(
        flops=int(b_pad * flops_per_col),
        transcendentals=int(b_pad),
        bytes_accessed=int(4 * b_pad * (P + NUM_NEW_FEATURES + 1) + weight_bytes),
    )

    out = pl.pallas_call(
        net_kernel,
        out_shape=jax.ShapeDtypeStruct((1, b_pad), jnp.float32),
        grid_spec=pltpu.PrefetchScalarGridSpec(
            num_scalar_prefetch=0,
            grid=grid,
            in_specs=in_specs,
            out_specs=pl.BlockSpec((1, b_tile), batch_spec),
        ),
        compiler_params=pltpu.CompilerParams(
            dimension_semantics=("parallel",),          # shard batch tiles across TCs (v7x)
            vmem_limit_bytes=32 * 1024 * 1024,          # working set is a few MiB << this
        ),
        cost_estimate=cost,
    )(pts_t, feats_t, *kparams)
    return out[0, :B]


def init_params(key):
    """Deterministic synthetic init mirroring nn.Linear: weight (out, in), bias (out, 1)."""
    def linear(k, din, dout):
        kw, kb = jax.random.split(k)
        s = 1.0 / np.sqrt(din)
        w = jax.random.uniform(kw, (dout, din), jnp.float32, -s, s)
        b = jax.random.uniform(kb, (dout, 1), jnp.float32, -s, s)
        return w, b

    keys = jax.random.split(key, 7)
    wi0, bi0 = linear(keys[0], 1, WIDTH_IN)
    wi1, bi1 = linear(keys[1], WIDTH_IN, WIDTH_IN)
    wi2, bi2 = linear(keys[2], WIDTH_IN, WIDTH_IN)
    wo0, bo0 = linear(keys[3], WIDTH_IN + NUM_NEW_FEATURES, WIDTHS_OUT[0])
    wo1, bo1 = linear(keys[4], WIDTHS_OUT[0], WIDTHS_OUT[1])
    wo2, bo2 = linear(keys[5], WIDTHS_OUT[1], WIDTHS_OUT[2])
    wo3, bo3 = linear(keys[6], WIDTHS_OUT[2], 1)
    return [wi0, bi0, wi1, bi1, wi2, bi2, wo0, bo0, wo1, bo1, wo2, bo2, wo3, bo3]


def prepare_params(raw_params, P, *, mxu_dtype=jnp.bfloat16):
    """One-time host-side weight prep for the kernel:
    block-diagonal input-side weights (one matmul per layer for all P points), the 1/P
    mean-pool folded into oLayer0's tiled weight, oLayer0 pre-split so the kernel never
    concatenates in VMEM, and matmul weights cast to the MXU dtype (biases + tiny last layer f32)."""
    (wi0, bi0, wi1, bi1, wi2, bi2, wo0, bo0, wo1, bo1, wo2, bo2, wo3, bo3) = raw_params
    eye_p = jnp.eye(P, dtype=jnp.float32)
    w1bd = jnp.kron(eye_p, wi0)                       # (P*16, P)     Linear(1->16) per point
    w2bd = jnp.kron(eye_p, wi1)                       # (P*16, P*16)  block-diag Linear(16->16)
    w3bd = jnp.kron(eye_p, wi2)                       # (P*16, P*16)
    b1t = jnp.tile(bi0, (P, 1))                       # (P*16, 1)
    b2t = jnp.tile(bi1, (P, 1))
    b3t = jnp.tile(bi2, (P, 1))
    wo0g, wo0f = wo0[:, :WIDTH_IN], wo0[:, WIDTH_IN:]
    wo0gp = jnp.tile(wo0g, (1, P)) * (1.0 / P)        # (128, P*16): 1/P mean-pool folded in
    cast = lambda w: w.astype(mxu_dtype)              # noqa: E731
    return [cast(w1bd), b1t, cast(w2bd), b2t, cast(w3bd), b3t,
            cast(wo0gp), cast(wo0f), bo0, cast(wo1), bo1, cast(wo2), bo2,
            wo3.astype(jnp.float32), bo3]


def net_reference(points, feats, raw_params):
    """Pure-JAX f32 reference of the torch forward pass (for correctness check)."""
    (wi0, bi0, wi1, bi1, wi2, bi2, wo0, bo0, wo1, bo1, wo2, bo2, wo3, bo3) = raw_params
    h = jnp.maximum(points[:, :, None] * wi0[:, 0] + bi0[:, 0], 0.0)   # (B, P, 16)
    h = jnp.maximum(h @ wi1.T + bi1[:, 0], 0.0)
    h = jnp.maximum(h @ wi2.T + bi2[:, 0], 0.0)
    g = h.mean(axis=1)                                                 # (B, 16)
    z = jnp.concatenate([g, feats], axis=-1)                           # (B, 40)
    z = jnp.maximum(z @ wo0.T + bo0[:, 0], 0.0)
    z = jnp.maximum(z @ wo1.T + bo1[:, 0], 0.0)
    z = jnp.maximum(z @ wo2.T + bo2[:, 0], 0.0)
    z = jax.nn.sigmoid(z @ wo3.T + bo3[:, 0])
    return z[:, 0]


if __name__ == "__main__":
    key = jax.random.PRNGKey(0)
    kpts, kfeat, kparam, kpts2, kfeat2 = jax.random.split(key, 5)

    P = 8  # 8 single-feature points per auction
    raw_params = init_params(kparam)
    kparams = prepare_params(raw_params, P)

    # Small case: 4 auctions.
    B = 4
    points = jax.random.normal(kpts, (B, P), jnp.float32)
    added_features = jax.random.normal(kfeat, (B, NUM_NEW_FEATURES), jnp.float32)
    out = net_forward(points, added_features, kparams)
    jax.block_until_ready(out)
    ref = net_reference(points, added_features, raw_params)
    # bf16 MXU operands (f32 accumulate / f32 elementwise) vs f32 reference -> loose tolerance.
    np.testing.assert_allclose(np.asarray(out), np.asarray(ref), rtol=4e-2, atol=4e-2)

    # Slightly larger case: exercises batch padding and a multi-step "parallel" grid.
    B2 = 260
    points2 = jax.random.normal(kpts2, (B2, P), jnp.float32)
    added_features2 = jax.random.normal(kfeat2, (B2, NUM_NEW_FEATURES), jnp.float32)
    out2 = net_forward(points2, added_features2, kparams)
    jax.block_until_ready(out2)
    ref2 = net_reference(points2, added_features2, raw_params)
    np.testing.assert_allclose(np.asarray(out2), np.asarray(ref2), rtol=4e-2, atol=4e-2)

    print("KERNEL_OK")
</pallas_src>

<mosaic_0001>
module attributes {stable_mosaic.version = 11 : i64} {
  func.func @net_kernel(%arg0: i32, %arg1: memref<8x128xf32, #tpu.memory_space<vmem>>, %arg2: memref<24x128xf32, #tpu.memory_space<vmem>>, %arg3: memref<128x8xbf16, #tpu.memory_space<vmem>>, %arg4: memref<128x1xf32, #tpu.memory_space<vmem>>, %arg5: memref<128x128xbf16, #tpu.memory_space<vmem>>, %arg6: memref<128x1xf32, #tpu.memory_space<vmem>>, %arg7: memref<128x128xbf16, #tpu.memory_space<vmem>>, %arg8: memref<128x1xf32, #tpu.memory_space<vmem>>, %arg9: memref<128x128xbf16, #tpu.memory_space<vmem>>, %arg10: memref<128x24xbf16, #tpu.memory_space<vmem>>, %arg11: memref<128x1xf32, #tpu.memory_space<vmem>>, %arg12: memref<64x128xbf16, #tpu.memory_space<vmem>>, %arg13: memref<64x1xf32, #tpu.memory_space<vmem>>, %arg14: memref<32x64xbf16, #tpu.memory_space<vmem>>, %arg15: memref<32x1xf32, #tpu.memory_space<vmem>>, %arg16: memref<1x32xf32, #tpu.memory_space<vmem>>, %arg17: memref<1x1xf32, #tpu.memory_space<vmem>>, %arg18: memref<1x128xf32, #tpu.memory_space<vmem>>) attributes {dimension_semantics = [#tpu.dimension_semantics<parallel>], iteration_bounds = array<i64: 1>, scalar_prefetch = 0 : i64, scratch_operands = 0 : i64, tpu.core_type = #tpu.core_type<tc>, window_params = [{transform_indices = @transform_0, window_bounds = array<i64: 8, 128>}, {transform_indices = @transform_1, window_bounds = array<i64: 24, 128>}, {pipeline_mode = #tpu.pipeline_mode<synchronous>, transform_indices = @transform_2, window_bounds = array<i64: 128, 8>}, {pipeline_mode = #tpu.pipeline_mode<synchronous>, transform_indices = @transform_3, window_bounds = array<i64: 128, 1>}, {pipeline_mode = #tpu.pipeline_mode<synchronous>, transform_indices = @transform_4, window_bounds = array<i64: 128, 128>}, {pipeline_mode = #tpu.pipeline_mode<synchronous>, transform_indices = @transform_5, window_bounds = array<i64: 128, 1>}, {pipeline_mode = #tpu.pipeline_mode<synchronous>, transform_indices = @transform_6, window_bounds = array<i64: 128, 128>}, {pipeline_mode = #tpu.pipeline_mode<synchronous>, transform_indices = @transform_7, window_bounds = array<i64: 128, 1>}, {pipeline_mode = #tpu.pipeline_mode<synchronous>, transform_indices = @transform_8, window_bounds = array<i64: 128, 128>}, {pipeline_mode = #tpu.pipeline_mode<synchronous>, transform_indices = @transform_9, window_bounds = array<i64: 128, 24>}, {pipeline_mode = #tpu.pipeline_mode<synchronous>, transform_indices = @transform_10, window_bounds = array<i64: 128, 1>}, {pipeline_mode = #tpu.pipeline_mode<synchronous>, transform_indices = @transform_11, window_bounds = array<i64: 64, 128>}, {pipeline_mode = #tpu.pipeline_mode<synchronous>, transform_indices = @transform_12, window_bounds = array<i64: 64, 1>}, {pipeline_mode = #tpu.pipeline_mode<synchronous>, transform_indices = @transform_13, window_bounds = array<i64: 32, 64>}, {pipeline_mode = #tpu.pipeline_mode<synchronous>, transform_indices = @transform_14, window_bounds = array<i64: 32, 1>}, {pipeline_mode = #tpu.pipeline_mode<synchronous>, transform_indices = @transform_15, window_bounds = array<i64: 1, 32>}, {pipeline_mode = #tpu.pipeline_mode<synchronous>, transform_indices = @transform_16, window_bounds = array<i64: 1, 1>}, {transform_indices = @transform_17, window_bounds = array<i64: 1, 128>}]} {
    %c0 = arith.constant 0 : index
    %c0_0 = arith.constant 0 : index
    %0 = vector.load %arg1[%c0, %c0_0] : memref<8x128xf32, #tpu.memory_space<vmem>>, vector<8x128xf32>
    %c0_1 = arith.constant 0 : index
    %c0_2 = arith.constant 0 : index
    %1 = vector.load %arg2[%c0_1, %c0_2] : memref<24x128xf32, #tpu.memory_space<vmem>>, vector<24x128xf32>
    %c0_3 = arith.constant 0 : index
    %c0_4 = arith.constant 0 : index
    %2 = vector.load %arg3[%c0_3, %c0_4] : memref<128x8xbf16, #tpu.memory_space<vmem>>, vector<128x8xbf16>
    %3 = arith.truncf %0 : vector<8x128xf32> to vector<8x128xbf16>
    %cst = arith.constant dense<0.000000e+00> : vector<128x128xf32>
    %4 = tpu.matmul %2, %3, %cst {dimension_numbers = #tpu.dot_dimension_numbers<[1], [0], [0], [1], [0, 0, 1, 1], [], []>} : vector<128x8xbf16>, vector<8x128xbf16>, vector<128x128xf32> -> vector<128x128xf32>
    %c0_5 = arith.constant 0 : index
    %c0_6 = arith.constant 0 : index
    %5 = vector.load %arg4[%c0_5, %c0_6] : memref<128x1xf32, #tpu.memory_space<vmem>>, vector<128x1xf32>
    %6 = vector.broadcast %5 : vector<128x1xf32> to vector<128x128xf32>
    %7 = arith.addf %4, %6 : vector<128x128xf32>
    %cst_7 = arith.constant 0.000000e+00 : f32
    %8 = vector.broadcast %cst_7 : f32 to vector<128x128xf32>
    %9 = arith.maximumf %7, %8 : vector<128x128xf32>
    %c0_8 = arith.constant 0 : index
    %c0_9 = arith.constant 0 : index
    %10 = vector.load %arg5[%c0_8, %c0_9] : memref<128x128xbf16, #tpu.memory_space<vmem>>, vector<128x128xbf16>
    %11 = arith.truncf %9 : vector<128x128xf32> to vector<128x128xbf16>
    %cst_10 = arith.constant dense<0.000000e+00> : vector<128x128xf32>
    %12 = tpu.matmul %10, %11, %cst_10 {dimension_numbers = #tpu.dot_dimension_numbers<[1], [0], [0], [1], [0, 0, 1, 1], [], []>} : vector<128x128xbf16>, vector<128x128xbf16>, vector<128x128xf32> -> vector<128x128xf32>
    %c0_11 = arith.constant 0 : index
    %c0_12 = arith.constant 0 : index
    %13 = vector.load %arg6[%c0_11, %c0_12] : memref<128x1xf32, #tpu.memory_space<vmem>>, vector<128x1xf32>
    %14 = vector.broadcast %13 : vector<128x1xf32> to vector<128x128xf32>
    %15 = arith.addf %12, %14 : vector<128x128xf32>
    %cst_13 = arith.constant 0.000000e+00 : f32
    %16 = vector.broadcast %cst_13 : f32 to vector<128x128xf32>
    %17 = arith.maximumf %15, %16 : vector<128x128xf32>
    %c0_14 = arith.constant 0 : index
    %c0_15 = arith.constant 0 : index
    %18 = vector.load %arg7[%c0_14, %c0_15] : memref<128x128xbf16, #tpu.memory_space<vmem>>, vector<128x128xbf16>
    %19 = arith.truncf %17 : vector<128x128xf32> to vector<128x128xbf16>
    %cst_16 = arith.constant dense<0.000000e+00> : vector<128x128xf32>
    %20 = tpu.matmul %18, %19, %cst_16 {dimension_numbers = #tpu.dot_dimension_numbers<[1], [0], [0], [1], [0, 0, 1, 1], [], []>} : vector<128x128xbf16>, vector<128x128xbf16>, vector<128x128xf32> -> vector<128x128xf32>
    %c0_17 = arith.constant 0 : index
    %c0_18 = arith.constant 0 : index
    %21 = vector.load %arg8[%c0_17, %c0_18] : memref<128x1xf32, #tpu.memory_space<vmem>>, vector<128x1xf32>
    %22 = vector.broadcast %21 : vector<128x1xf32> to vector<128x128xf32>
    %23 = arith.addf %20, %22 : vector<128x128xf32>
    %cst_19 = arith.constant 0.000000e+00 : f32
    %24 = vector.broadcast %cst_19 : f32 to vector<128x128xf32>
    %25 = arith.maximumf %23, %24 : vector<128x128xf32>
    %c0_20 = arith.constant 0 : index
    %c0_21 = arith.constant 0 : index
    %26 = vector.load %arg9[%c0_20, %c0_21] : memref<128x128xbf16, #tpu.memory_space<vmem>>, vector<128x128xbf16>
    %27 = arith.truncf %25 : vector<128x128xf32> to vector<128x128xbf16>
    %cst_22 = arith.constant dense<0.000000e+00> : vector<128x128xf32>
    %28 = tpu.matmul %26, %27, %cst_22 {dimension_numbers = #tpu.dot_dimension_numbers<[1], [0], [0], [1], [0, 0, 1, 1], [], []>} : vector<128x128xbf16>, vector<128x128xbf16>, vector<128x128xf32> -> vector<128x128xf32>
    %c0_23 = arith.constant 0 : index
    %c0_24 = arith.constant 0 : index
    %29 = vector.load %arg10[%c0_23, %c0_24] : memref<128x24xbf16, #tpu.memory_space<vmem>>, vector<128x24xbf16>
    %30 = arith.truncf %1 : vector<24x128xf32> to vector<24x128xbf16>
    %cst_25 = arith.constant dense<0.000000e+00> : vector<128x128xf32>
    %31 = tpu.matmul %29, %30, %cst_25 {dimension_numbers = #tpu.dot_dimension_numbers<[1], [0], [0], [1], [0, 0, 1, 1], [], []>} : vector<128x24xbf16>, vector<24x128xbf16>, vector<128x128xf32> -> vector<128x128xf32>
    %32 = arith.addf %28, %31 : vector<128x128xf32>
    %c0_26 = arith.constant 0 : index
    %c0_27 = arith.constant 0 : index
    %33 = vector.load %arg11[%c0_26, %c0_27] : memref<128x1xf32, #tpu.memory_space<vmem>>, vector<128x1xf32>
    %34 = vector.broadcast %33 : vector<128x1xf32> to vector<128x128xf32>
    %35 = arith.addf %32, %34 : vector<128x128xf32>
    %cst_28 = arith.constant 0.000000e+00 : f32
    %36 = vector.broadcast %cst_28 : f32 to vector<128x128xf32>
    %37 = arith.maximumf %35, %36 : vector<128x128xf32>
    %c0_29 = arith.constant 0 : index
    %c0_30 = arith.constant 0 : index
    %38 = vector.load %arg12[%c0_29, %c0_30] : memref<64x128xbf16, #tpu.memory_space<vmem>>, vector<64x128xbf16>
    %39 = arith.truncf %37 : vector<128x128xf32> to vector<128x128xbf16>
    %cst_31 = arith.constant dense<0.000000e+00> : vector<64x128xf32>
    %40 = tpu.matmul %38, %39, %cst_31 {dimension_numbers = #tpu.dot_dimension_numbers<[1], [0], [0], [1], [0, 0, 1, 1], [], []>} : vector<64x128xbf16>, vector<128x128xbf16>, vector<64x128xf32> -> vector<64x128xf32>
    %c0_32 = arith.constant 0 : index
    %c0_33 = arith.constant 0 : index
    %41 = vector.load %arg13[%c0_32, %c0_33] : memref<64x1xf32, #tpu.memory_space<vmem>>, vector<64x1xf32>
    %42 = vector.broadcast %41 : vector<64x1xf32> to vector<64x128xf32>
    %43 = arith.addf %40, %42 : vector<64x128xf32>
    %cst_34 = arith.constant 0.000000e+00 : f32
    %44 = vector.broadcast %cst_34 : f32 to vector<64x128xf32>
    %45 = arith.maximumf %43, %44 : vector<64x128xf32>
    %c0_35 = arith.constant 0 : index
    %c0_36 = arith.constant 0 : index
    %46 = vector.load %arg14[%c0_35, %c0_36] : memref<32x64xbf16, #tpu.memory_space<vmem>>, vector<32x64xbf16>
    %47 = arith.truncf %45 : vector<64x128xf32> to vector<64x128xbf16>
    %cst_37 = arith.constant dense<0.000000e+00> : vector<32x128xf32>
    %48 = tpu.matmul %46, %47, %cst_37 {dimension_numbers = #tpu.dot_dimension_numbers<[1], [0], [0], [1], [0, 0, 1, 1], [], []>} : vector<32x64xbf16>, vector<64x128xbf16>, vector<32x128xf32> -> vector<32x128xf32>
    %c0_38 = arith.constant 0 : index
    %c0_39 = arith.constant 0 : index
    %49 = vector.load %arg15[%c0_38, %c0_39] : memref<32x1xf32, #tpu.memory_space<vmem>>, vector<32x1xf32>
    %50 = vector.broadcast %49 : vector<32x1xf32> to vector<32x128xf32>
    %51 = arith.addf %48, %50 : vector<32x128xf32>
    %cst_40 = arith.constant 0.000000e+00 : f32
    %52 = vector.broadcast %cst_40 : f32 to vector<32x128xf32>
    %53 = arith.maximumf %51, %52 : vector<32x128xf32>
    %c0_41 = arith.constant 0 : index
    %c0_42 = arith.constant 0 : index
    %54 = vector.load %arg16[%c0_41, %c0_42] : memref<1x32xf32, #tpu.memory_space<vmem>>, vector<1x32xf32>
    %cst_43 = arith.constant dense<0.000000e+00> : vector<1x128xf32>
    %55 = tpu.matmul %54, %53, %cst_43 {dimension_numbers = #tpu.dot_dimension_numbers<[1], [0], [0], [1], [0, 0, 1, 1], [], []>} : vector<1x32xf32>, vector<32x128xf32>, vector<1x128xf32> -> vector<1x128xf32>
    %c0_44 = arith.constant 0 : index
    %c0_45 = arith.constant 0 : index
    %56 = vector.load %arg17[%c0_44, %c0_45] : memref<1x1xf32, #tpu.memory_space<vmem>>, vector<1x1xf32>
    %57 = vector.broadcast %56 : vector<1x1xf32> to vector<1x128xf32>
    %58 = arith.addf %55, %57 : vector<1x128xf32>
    %59 = arith.negf %58 : vector<1x128xf32>
    %60 = math.exp %59 : vector<1x128xf32>
    %cst_46 = arith.constant 1.000000e+00 : f32
    %61 = vector.broadcast %cst_46 : f32 to vector<1x128xf32>
    %62 = arith.addf %61, %60 : vector<1x128xf32>
    %63 = arith.divf %61, %62 : vector<1x128xf32>
    %c0_47 = arith.constant 0 : index
    %c0_48 = arith.constant 0 : index
    %64 = vector.load %arg18[%c0_47, %c0_48] : memref<1x128xf32, #tpu.memory_space<vmem>>, vector<1x128xf32>
    tpu.vector_store %arg18[%c0_47, %c0_48], %63 {strides = array<i32>} : memref<1x128xf32, #tpu.memory_space<vmem>>, vector<1x128xf32>,
    return
  }
  func.func @transform_0(%arg0: i32) -> (i32, i32) {
    %c0_i32 = arith.constant 0 : i32
    %c0_i32_0 = arith.constant 0 : i32
    return %c0_i32, %arg0 : i32, i32
  }
  func.func @transform_1(%arg0: i32) -> (i32, i32) {
    %c0_i32 = arith.constant 0 : i32
    %c0_i32_0 = arith.constant 0 : i32
    return %c0_i32, %arg0 : i32, i32
  }
  func.func @transform_2(%arg0: i32) -> (i32, i32) {
    %c0_i32 = arith.constant 0 : i32
    %c0_i32_0 = arith.constant 0 : i32
    %c0_i32_1 = arith.constant 0 : i32
    return %c0_i32, %c0_i32_0 : i32, i32
  }
  func.func @transform_3(%arg0: i32) -> (i32, i32) {
    %c0_i32 = arith.constant 0 : i32
    %c0_i32_0 = arith.constant 0 : i32
    %c0_i32_1 = arith.constant 0 : i32
    return %c0_i32, %c0_i32_0 : i32, i32
  }
  func.func @transform_4(%arg0: i32) -> (i32, i32) {
    %c0_i32 = arith.constant 0 : i32
    %c0_i32_0 = arith.constant 0 : i32
    %c0_i32_1 = arith.constant 0 : i32
    return %c0_i32, %c0_i32_0 : i32, i32
  }
  func.func @transform_5(%arg0: i32) -> (i32, i32) {
    %c0_i32 = arith.constant 0 : i32
    %c0_i32_0 = arith.constant 0 : i32
    %c0_i32_1 = arith.constant 0 : i32
    return %c0_i32, %c0_i32_0 : i32, i32
  }
  func.func @transform_6(%arg0: i32) -> (i32, i32) {
    %c0_i32 = arith.constant 0 : i32
    %c0_i32_0 = arith.constant 0 : i32
    %c0_i32_1 = arith.constant 0 : i32
    return %c0_i32, %c0_i32_0 : i32, i32
  }
  func.func @transform_7(%arg0: i32) -> (i32, i32) {
    %c0_i32 = arith.constant 0 : i32
    %c0_i32_0 = arith.constant 0 : i32
    %c0_i32_1 = arith.constant 0 : i32
    return %c0_i32, %c0_i32_0 : i32, i32
  }
  func.func @transform_8(%arg0: i32) -> (i32, i32) {
    %c0_i32 = arith.constant 0 : i32
    %c0_i32_0 = arith.constant 0 : i32
    %c0_i32_1 = arith.constant 0 : i32
    return %c0_i32, %c0_i32_0 : i32, i32
  }
  func.func @transform_9(%arg0: i32) -> (i32, i32) {
    %c0_i32 = arith.constant 0 : i32
    %c0_i32_0 = arith.constant 0 : i32
    %c0_i32_1 = arith.constant 0 : i32
    return %c0_i32, %c0_i32_0 : i32, i32
  }
  func.func @transform_10(%arg0: i32) -> (i32, i32) {
    %c0_i32 = arith.constant 0 : i32
    %c0_i32_0 = arith.constant 0 : i32
    %c0_i32_1 = arith.constant 0 : i32
    return %c0_i32, %c0_i32_0 : i32, i32
  }
  func.func @transform_11(%arg0: i32) -> (i32, i32) {
    %c0_i32 = arith.constant 0 : i32
    %c0_i32_0 = arith.constant 0 : i32
    %c0_i32_1 = arith.constant 0 : i32
    return %c0_i32, %c0_i32_0 : i32, i32
  }
  func.func @transform_12(%arg0: i32) -> (i32, i32) {
    %c0_i32 = arith.constant 0 : i32
    %c0_i32_0 = arith.constant 0 : i32
    %c0_i32_1 = arith.constant 0 : i32
    return %c0_i32, %c0_i32_0 : i32, i32
  }
  func.func @transform_13(%arg0: i32) -> (i32, i32) {
    %c0_i32 = arith.constant 0 : i32
    %c0_i32_0 = arith.constant 0 : i32
    %c0_i32_1 = arith.constant 0 : i32
    return %c0_i32, %c0_i32_0 : i32, i32
  }
  func.func @transform_14(%arg0: i32) -> (i32, i32) {
    %c0_i32 = arith.constant 0 : i32
    %c0_i32_0 = arith.constant 0 : i32
    %c0_i32_1 = arith.constant 0 : i32
    return %c0_i32, %c0_i32_0 : i32, i32
  }
  func.func @transform_15(%arg0: i32) -> (i32, i32) {
    %c0_i32 = arith.constant 0 : i32
    %c0_i32_0 = arith.constant 0 : i32
    %c0_i32_1 = arith.constant 0 : i32
    return %c0_i32, %c0_i32_0 : i32, i32
  }
  func.func @transform_16(%arg0: i32) -> (i32, i32) {
    %c0_i32 = arith.constant 0 : i32
    %c0_i32_0 = arith.constant 0 : i32
    %c0_i32_1 = arith.constant 0 : i32
    return %c0_i32, %c0_i32_0 : i32, i32
  }
  func.func @transform_17(%arg0: i32) -> (i32, i32) {
    %c0_i32 = arith.constant 0 : i32
    %c0_i32_0 = arith.constant 0 : i32
    return %c0_i32, %arg0 : i32, i32
  }
}

</mosaic_0001>

<llo_original>
// kernel: tpu_custom_call.1
$region0: #{tpu_custom_call.1}
  #allocation0 [shape = 'u32[]', space=smem, size = 0x4, offset = 0x4, fixed_abs, tag = 'smem constant byte address 0x4 - core index']
  #allocation1 [shape = 'u32[72,128]{1,0:T(1,128)}', space=vmem, size = 0x9000, scoped, tag = 'internal scratch']
  #allocation2 [shape = 'f32[1,1]{1,0:T(1,128)S(1)}', space=vmem, size = 0x200, scoped, tag = 'scoped memory for tpu_custom_call.1']
  %s0 = inlined_call_operand.vmem [shape: f32[8,128], index: 0, kind: input, shape index: {}]
  %s1 = inlined_call_operand.vmem [shape: f32[24,128], index: 1, kind: input, shape index: {}]
  %s2 = inlined_call_operand.vmem [shape: bf16[128,8], index: 2, kind: input, shape index: {}]
  %s3 = inlined_call_operand.vmem [shape: f32[128,1], index: 3, kind: input, shape index: {}]
  %s4 = inlined_call_operand.vmem [shape: bf16[128,128], index: 4, kind: input, shape index: {}]
  %s5 = inlined_call_operand.vmem [shape: f32[128,1], index: 5, kind: input, shape index: {}]
  %s6 = inlined_call_operand.vmem [shape: bf16[128,128], index: 6, kind: input, shape index: {}]
  %s7 = inlined_call_operand.vmem [shape: f32[128,1], index: 7, kind: input, shape index: {}]
  %s8 = inlined_call_operand.vmem [shape: bf16[128,128], index: 8, kind: input, shape index: {}]
  %s9 = inlined_call_operand.vmem [shape: bf16[128,24], index: 9, kind: input, shape index: {}]
  %s10 = inlined_call_operand.vmem [shape: f32[128,1], index: 10, kind: input, shape index: {}]
  %s11 = inlined_call_operand.vmem [shape: bf16[64,128], index: 11, kind: input, shape index: {}]
  %s12 = inlined_call_operand.vmem [shape: f32[64,1], index: 12, kind: input, shape index: {}]
  %s13 = inlined_call_operand.vmem [shape: bf16[32,64], index: 13, kind: input, shape index: {}]
  %s14 = inlined_call_operand.vmem [shape: f32[32,1], index: 14, kind: input, shape index: {}]
  %s15 = inlined_call_operand.vmem [shape: f32[1,32], index: 15, kind: input, shape index: {}]
  %s16 = inlined_call_operand.<no memory space> [shape: f32[1,1], index: 16, kind: input, shape index: {}]
  %s17 = inlined_call_operand.hbm [shape: f32[1,128], index: 17, kind: output, shape index: {}]
  %s18 = sld [smem:[#allocation0]]
  $region78: #{tpu_custom_call.1} parent=0
    _
  %s20 = ssub.s32 1, %s18
  %s21 = scalar_select 0, %s20, %s18
  %v22 = vstv %s16
  %23 = vst [vmem:[#allocation2] sm:$0x1] %v22
  $region1: #{tpu_custom_call.1} parent=0
    #allocation3 [shape = 'u8[512]{0}', space=vmem, size = 0x400, scoped, tag = 'output window, operand 0, single buffered']
    #allocation4 [shape = 's32[1]{0}', space=sflag, size = 0x4, scoped, tag = 'scoped memory for tpu_custom_call.1']
    %24 = vsyncpa [#allocation4], 0
    // Predicated region
    $region2: #{tpu_custom_call.1} parent=1 // pred_check
      _
    $region3: #{tpu_custom_call.1} parent=1 // pred_check_branch
      %26 = sbr.rel (0) target = $region5
    $region4: #{tpu_custom_call.1} parent=1 // pred_region
      _
    $region5: #{tpu_custom_call.1} parent=1 // pred_fallthru
      _
    // Predicated region
    $region6: #{tpu_custom_call.1} parent=1 // pred_check
      _
    $region7: #{tpu_custom_call.1} parent=1 // pred_check_branch
      %28 = sbr.rel (0) target = $region9
    $region8: #{tpu_custom_call.1} parent=1 // pred_region
      _
    $region9: #{tpu_custom_call.1} parent=1 // pred_fallthru
      _
    // Predicated region
    $region10: #{tpu_custom_call.1} parent=1 // pred_check
      _
    $region11: #{tpu_custom_call.1} parent=1 // pred_check_branch
      %30 = sbr.rel (0) target = $region13
    $region12: #{tpu_custom_call.1} parent=1 // pred_region
      _
    $region13: #{tpu_custom_call.1} parent=1 // pred_fallthru
      _
    // Predicated region
    $region14: #{tpu_custom_call.1} parent=1 // pred_check
      _
    $region15: #{tpu_custom_call.1} parent=1 // pred_check_branch
      %32 = sbr.rel (0) target = $region17
    $region16: #{tpu_custom_call.1} parent=1 // pred_region
      _
    $region17: #{tpu_custom_call.1} parent=1 // pred_fallthru
      _
    // Predicated region
    $region18: #{tpu_custom_call.1} parent=1 // pred_check
      _
    $region19: #{tpu_custom_call.1} parent=1 // pred_check_branch
      %34 = sbr.rel (0) target = $region21
    $region20: #{tpu_custom_call.1} parent=1 // pred_region
      _
    $region21: #{tpu_custom_call.1} parent=1 // pred_fallthru
      _
    // Predicated region
    $region22: #{tpu_custom_call.1} parent=1 // pred_check
      _
    $region23: #{tpu_custom_call.1} parent=1 // pred_check_branch
      %36 = sbr.rel (0) target = $region25
    $region24: #{tpu_custom_call.1} parent=1 // pred_region
      _
    $region25: #{tpu_custom_call.1} parent=1 // pred_fallthru
      _
    // Predicated region
    $region26: #{tpu_custom_call.1} parent=1 // pred_check
      _
    $region27: #{tpu_custom_call.1} parent=1 // pred_check_branch
      %38 = sbr.rel (0) target = $region29
    $region28: #{tpu_custom_call.1} parent=1 // pred_region
      _
    $region29: #{tpu_custom_call.1} parent=1 // pred_fallthru
      _
    // Predicated region
    $region30: #{tpu_custom_call.1} parent=1 // pred_check
      _
    $region31: #{tpu_custom_call.1} parent=1 // pred_check_branch
      %40 = sbr.rel (0) target = $region33
    $region32: #{tpu_custom_call.1} parent=1 // pred_region
      _
    $region33: #{tpu_custom_call.1} parent=1 // pred_fallthru
      _
    // Predicated region
    $region34: #{tpu_custom_call.1} parent=1 // pred_check
      _
    $region35: #{tpu_custom_call.1} parent=1 // pred_check_branch
      %42 = sbr.rel (0) target = $region37
    $region36: #{tpu_custom_call.1} parent=1 // pred_region
      _
    $region37: #{tpu_custom_call.1} parent=1 // pred_fallthru
      _
    // Predicated region
    $region38: #{tpu_custom_call.1} parent=1 // pred_check
      _
    $region39: #{tpu_custom_call.1} parent=1 // pred_check_branch
      %44 = sbr.rel (0) target = $region41
    $region40: #{tpu_custom_call.1} parent=1 // pred_region
      _
    $region41: #{tpu_custom_call.1} parent=1 // pred_fallthru
      _
    // Predicated region
    $region42: #{tpu_custom_call.1} parent=1 // pred_check
      _
    $region43: #{tpu_custom_call.1} parent=1 // pred_check_branch
      %46 = sbr.rel (0) target = $region45
    $region44: #{tpu_custom_call.1} parent=1 // pred_region
      _
    $region45: #{tpu_custom_call.1} parent=1 // pred_fallthru
      _
    // Predicated region
    $region46: #{tpu_custom_call.1} parent=1 // pred_check
      _
    $region47: #{tpu_custom_call.1} parent=1 // pred_check_branch
      %48 = sbr.rel (0) target = $region49
    $region48: #{tpu_custom_call.1} parent=1 // pred_region
      _
    $region49: #{tpu_custom_call.1} parent=1 // pred_fallthru
      _
    // Predicated region
    $region50: #{tpu_custom_call.1} parent=1 // pred_check
      _
    $region51: #{tpu_custom_call.1} parent=1 // pred_check_branch
      %50 = sbr.rel (0) target = $region53
    $region52: #{tpu_custom_call.1} parent=1 // pred_region
      _
    $region53: #{tpu_custom_call.1} parent=1 // pred_fallthru
      _
    // Predicated region
    $region54: #{tpu_custom_call.1} parent=1 // pred_check
      _
    $region55: #{tpu_custom_call.1} parent=1 // pred_check_branch
      %52 = sbr.rel (0) target = $region57
    $region56: #{tpu_custom_call.1} parent=1 // pred_region
      _
    $region57: #{tpu_custom_call.1} parent=1 // pred_fallthru
      _
    // Predicated region
    $region58: #{tpu_custom_call.1} parent=1 // pred_check
      _
    $region59: #{tpu_custom_call.1} parent=1 // pred_check_branch
      %54 = sbr.rel (0) target = $region61
    $region60: #{tpu_custom_call.1} parent=1 // pred_region
      _
    $region61: #{tpu_custom_call.1} parent=1 // pred_fallthru
      _
    // Predicated region
    $region62: #{tpu_custom_call.1} parent=1 // pred_check
      _
    $region63: #{tpu_custom_call.1} parent=1 // pred_check_branch
      %56 = sbr.rel (0) target = $region65
    $region64: #{tpu_custom_call.1} parent=1 // pred_region
      _
    $region65: #{tpu_custom_call.1} parent=1 // pred_fallthru
      _
    // Predicated region
    $region66: #{tpu_custom_call.1} parent=1 // pred_check
      _
    $region67: #{tpu_custom_call.1} parent=1 // pred_check_branch
      %58 = sbr.rel (0) target = $region69
    $region68: #{tpu_custom_call.1} parent=1 // pred_region
      _
    $region69: #{tpu_custom_call.1} parent=1 // pred_fallthru
      _
    %v60 = vld [vmem:[%s0] sm:$0xff]
    %v61 = vld [vmem:[%s1] sm:$0xff]
    %v62 = vld [vmem:[%s1 + $0x8] sm:$0xff]
    %v63 = vld [vmem:[%s1 + $0x10] sm:$0xff]
    %v64 = vld [vmem:[%s2] sm:$0xf]
    %v65 = vld [vmem:[%s2 + $0x4] sm:$0xf]
    %v66 = vld [vmem:[%s2 + $0x8] sm:$0xf]
    %v67 = vld [vmem:[%s2 + $0xc] sm:$0xf]
    %v68 = vld [vmem:[%s2 + $0x10] sm:$0xf]
    %v69 = vld [vmem:[%s2 + $0x14] sm:$0xf]
    %v70 = vld [vmem:[%s2 + $0x18] sm:$0xf]
    %v71 = vld [vmem:[%s2 + $0x1c] sm:$0xf]
    %v72 = vld [vmem:[%s2 + $0x20] sm:$0xf]
    %v73 = vld [vmem:[%s2 + $0x24] sm:$0xf]
    %v74 = vld [vmem:[%s2 + $0x28] sm:$0xf]
    %v75 = vld [vmem:[%s2 + $0x2c] sm:$0xf]
    %v76 = vld [vmem:[%s2 + $0x30] sm:$0xf]
    %v77 = vld [vmem:[%s2 + $0x34] sm:$0xf]
    %v78 = vld [vmem:[%s2 + $0x38] sm:$0xf]
    %v79 = vld [vmem:[%s2 + $0x3c] sm:$0xf]
    %v80 = vpack.c.bf16 %v60, %v60
    %v81 = vld [vmem:[%s3] sm:$0xff]
    %v82 = vld [vmem:[%s3 + $0x8] sm:$0xff]
    %v83 = vld [vmem:[%s3 + $0x10] sm:$0xff]
    %v84 = vld [vmem:[%s3 + $0x18] sm:$0xff]
    %v85 = vld [vmem:[%s3 + $0x20] sm:$0xff]
    %v86 = vld [vmem:[%s3 + $0x28] sm:$0xff]
    %v87 = vld [vmem:[%s3 + $0x30] sm:$0xff]
    %v88 = vld [vmem:[%s3 + $0x38] sm:$0xff]
    %v89 = vld [vmem:[%s3 + $0x40] sm:$0xff]
    %v90 = vld [vmem:[%s3 + $0x48] sm:$0xff]
    %v91 = vld [vmem:[%s3 + $0x50] sm:$0xff]
    %v92 = vld [vmem:[%s3 + $0x58] sm:$0xff]
    %v93 = vld [vmem:[%s3 + $0x60] sm:$0xff]
    %v94 = vld [vmem:[%s3 + $0x68] sm:$0xff]
    %v95 = vld [vmem:[%s3 + $0x70] sm:$0xff]
    %v96 = vld [vmem:[%s3 + $0x78] sm:$0xff]
    %98 = vset.pattern.permute.xlu0 0
    %99 = vperm.xlu0 %98, %v81
    %v100 = vpop.permute.xlu0 %99
    %103 = vset.pattern.permute.xlu0 0
    %104 = vperm.xlu0 %103, %v82
    %v105 = vpop.permute.xlu0 %104
    %108 = vset.pattern.permute.xlu0 0
    %109 = vperm.xlu0 %108, %v83
    %v110 = vpop.permute.xlu0 %109
    %113 = vset.pattern.permute.xlu0 0
    %114 = vperm.xlu0 %113, %v84
    %v115 = vpop.permute.xlu0 %114
    %118 = vset.pattern.permute.xlu0 0
    %119 = vperm.xlu0 %118, %v85
    %v120 = vpop.permute.xlu0 %119
    %123 = vset.pattern.permute.xlu0 0
    %124 = vperm.xlu0 %123, %v86
    %v125 = vpop.permute.xlu0 %124
    %128 = vset.pattern.permute.xlu0 0
    %129 = vperm.xlu0 %128, %v87
    %v130 = vpop.permute.xlu0 %129
    %133 = vset.pattern.permute.xlu0 0
    %134 = vperm.xlu0 %133, %v88
    %v135 = vpop.permute.xlu0 %134
    %138 = vset.pattern.permute.xlu0 0
    %139 = vperm.xlu0 %138, %v89
    %v140 = vpop.permute.xlu0 %139
    %143 = vset.pattern.permute.xlu0 0
    %144 = vperm.xlu0 %143, %v90
    %v145 = vpop.permute.xlu0 %144
    %148 = vset.pattern.permute.xlu0 0
    %149 = vperm.xlu0 %148, %v91
    %v150 = vpop.permute.xlu0 %149
    %153 = vset.pattern.permute.xlu0 0
    %154 = vperm.xlu0 %153, %v92
    %v155 = vpop.permute.xlu0 %154
    %158 = vset.pattern.permute.xlu0 0
    %159 = vperm.xlu0 %158, %v93
    %v160 = vpop.permute.xlu0 %159
    %163 = vset.pattern.permute.xlu0 0
    %164 = vperm.xlu0 %163, %v94
    %v165 = vpop.permute.xlu0 %164
    %168 = vset.pattern.permute.xlu0 0
    %169 = vperm.xlu0 %168, %v95
    %v170 = vpop.permute.xlu0 %169
    %173 = vset.pattern.permute.xlu0 0
    %174 = vperm.xlu0 %173, %v96
    %v175 = vpop.permute.xlu0 %174
    %v193 = vunpack.c.l.b16 %v64
    %v194 = vunpack.c.l.b16 %v65
    %v195 = vunpack.c.l.b16 %v66
    %v196 = vunpack.c.l.b16 %v67
    %v197 = vunpack.c.l.b16 %v68
    %v198 = vunpack.c.l.b16 %v69
    %v199 = vunpack.c.l.b16 %v70
    %v200 = vunpack.c.l.b16 %v71
    %v201 = vunpack.c.l.b16 %v72
    %v202 = vunpack.c.l.b16 %v73
    %v203 = vunpack.c.l.b16 %v74
    %v204 = vunpack.c.l.b16 %v75
    %v205 = vunpack.c.l.b16 %v76
    %v206 = vunpack.c.l.b16 %v77
    %v207 = vunpack.c.l.b16 %v78
    %v208 = vunpack.c.l.b16 %v79
    %v209 = vpack.c.b16 %v194, %v193
    %v210 = vpack.c.b16 %v196, %v195
    %v211 = vpack.c.b16 %v198, %v197
    %v212 = vpack.c.b16 %v200, %v199
    %v213 = vpack.c.b16 %v202, %v201
    %v214 = vpack.c.b16 %v204, %v203
    %v215 = vpack.c.b16 %v206, %v205
    %v216 = vpack.c.b16 %v208, %v207
    %vm217 = vcmask 64512
    %v219 = vsel %vm217, %v209, 0
    %v222 = vsel %vm217, %v210, 0
    %v225 = vsel %vm217, %v211, 0
    %v228 = vsel %vm217, %v212, 0
    %v231 = vsel %vm217, %v213, 0
    %v234 = vsel %vm217, %v214, 0
    %v237 = vsel %vm217, %v215, 0
    %v240 = vsel %vm217, %v216, 0
    %vm242 = vcmask 1043456
    %v244 = vsel %vm242, %v80, 0
    %246 = vmatpush.bf16.msra.mxu0 0
    %247 = vmatpush.bf16.msra.mxu0 0
    %248 = vmatpush.bf16.msra.mxu0 0
    %249 = vmatpush.bf16.msra.mxu0 0
    %250 = vmatpush.bf16.msra.mxu0 0
    %251 = vmatpush.bf16.msra.mxu0 0
    %252 = vmatpush.bf16.msra.mxu0 0
    %253 = vmatpush.bf16.msra.mxu0 %v244
    %254 = vmatmul.bf16.gmra.mxu0 %v219
    %v255 = vpop.f32.mrf.mxu0
    %v256 = vadd.f32 %v100, %v255
    %v257 = vpop.f32.mrf.mxu0
    %v258 = vadd.f32 %v105, %v257
    %259 = vmatmul.bf16.gmra.mxu0 %v222
    %v260 = vpop.f32.mrf.mxu0
    %v261 = vadd.f32 %v110, %v260
    %v262 = vpop.f32.mrf.mxu0
    %v263 = vadd.f32 %v115, %v262
    %264 = vmatmul.bf16.gmra.mxu0 %v225
    %v265 = vpop.f32.mrf.mxu0
    %v266 = vadd.f32 %v120, %v265
    %v267 = vpop.f32.mrf.mxu0
    %v268 = vadd.f32 %v125, %v267
    %269 = vmatmul.bf16.gmra.mxu0 %v228
    %v270 = vpop.f32.mrf.mxu0
    %v271 = vadd.f32 %v130, %v270
    %v272 = vpop.f32.mrf.mxu0
    %v273 = vadd.f32 %v135, %v272
    %274 = vmatmul.bf16.gmra.mxu0 %v231
    %v275 = vpop.f32.mrf.mxu0
    %v276 = vadd.f32 %v140, %v275
    %v277 = vpop.f32.mrf.mxu0
    %v278 = vadd.f32 %v145, %v277
    %279 = vmatmul.bf16.gmra.mxu0 %v234
    %v280 = vpop.f32.mrf.mxu0
    %v281 = vadd.f32 %v150, %v280
    %v282 = vpop.f32.mrf.mxu0
    %v283 = vadd.f32 %v155, %v282
    %284 = vmatmul.bf16.gmra.mxu0 %v237
    %v285 = vpop.f32.mrf.mxu0
    %v286 = vadd.f32 %v160, %v285
    %v287 = vpop.f32.mrf.mxu0
    %v288 = vadd.f32 %v165, %v287
    %289 = vmatmul.bf16.gmra.mxu0 %v240
    %v290 = vpop.f32.mrf.mxu0
    %v291 = vadd.f32 %v170, %v290
    %v292 = vpop.f32.mrf.mxu0
    %v293 = vadd.f32 %v175, %v292
    %294 = vdwg.mxu0
    %v295 = vmax.f32 %v256, 0.0
    %v296 = vmax.f32 %v258, 0.0
    %v297 = vmax.f32 %v261, 0.0
    %v298 = vmax.f32 %v263, 0.0
    %v299 = vmax.f32 %v266, 0.0
    %v300 = vmax.f32 %v268, 0.0
    %v301 = vmax.f32 %v271, 0.0
    %v302 = vmax.f32 %v273, 0.0
    %v303 = vmax.f32 %v276, 0.0
    %v304 = vmax.f32 %v278, 0.0
    %v305 = vmax.f32 %v281, 0.0
    %v306 = vmax.f32 %v283, 0.0
    %v307 = vmax.f32 %v286, 0.0
    %v308 = vmax.f32 %v288, 0.0
    %v309 = vmax.f32 %v291, 0.0
    %v310 = vmax.f32 %v293, 0.0
    %v311 = vld [vmem:[%s4] sm:$0xf]
    %v312 = vld [vmem:[%s4 + $0x4] sm:$0xf]
    %v313 = vld [vmem:[%s4 + $0x8] sm:$0xf]
    %v314 = vld [vmem:[%s4 + $0xc] sm:$0xf]
    %v315 = vld [vmem:[%s4 + $0x10] sm:$0xf]
    %v316 = vld [vmem:[%s4 + $0x14] sm:$0xf]
    %v317 = vld [vmem:[%s4 + $0x18] sm:$0xf]
    %v318 = vld [vmem:[%s4 + $0x1c] sm:$0xf]
    %v319 = vld [vmem:[%s4 + $0x20] sm:$0xf]
    %v320 = vld [vmem:[%s4 + $0x24] sm:$0xf]
    %v321 = vld [vmem:[%s4 + $0x28] sm:$0xf]
    %v322 = vld [vmem:[%s4 + $0x2c] sm:$0xf]
    %v323 = vld [vmem:[%s4 + $0x30] sm:$0xf]
    %v324 = vld [vmem:[%s4 + $0x34] sm:$0xf]
    %v325 = vld [vmem:[%s4 + $0x38] sm:$0xf]
    %v326 = vld [vmem:[%s4 + $0x3c] sm:$0xf]
    %v327 = vpack.c.bf16 %v296, %v295
    %v328 = vpack.c.bf16 %v298, %v297
    %v329 = vpack.c.bf16 %v300, %v299
    %v330 = vpack.c.bf16 %v302, %v301
    %v331 = vpack.c.bf16 %v304, %v303
    %v332 = vpack.c.bf16 %v306, %v305
    %v333 = vpack.c.bf16 %v308, %v307
    %v334 = vpack.c.bf16 %v310, %v309
    %v335 = vld [vmem:[%s5] sm:$0xff]
    %v336 = vld [vmem:[%s5 + $0x8] sm:$0xff]
    %v337 = vld [vmem:[%s5 + $0x10] sm:$0xff]
    %v338 = vld [vmem:[%s5 + $0x18] sm:$0xff]
    %v339 = vld [vmem:[%s5 + $0x20] sm:$0xff]
    %v340 = vld [vmem:[%s5 + $0x28] sm:$0xff]
    %v341 = vld [vmem:[%s5 + $0x30] sm:$0xff]
    %v342 = vld [vmem:[%s5 + $0x38] sm:$0xff]
    %v343 = vld [vmem:[%s5 + $0x40] sm:$0xff]
    %v344 = vld [vmem:[%s5 + $0x48] sm:$0xff]
    %v345 = vld [vmem:[%s5 + $0x50] sm:$0xff]
    %v346 = vld [vmem:[%s5 + $0x58] sm:$0xff]
    %v347 = vld [vmem:[%s5 + $0x60] sm:$0xff]
    %v348 = vld [vmem:[%s5 + $0x68] sm:$0xff]
    %v349 = vld [vmem:[%s5 + $0x70] sm:$0xff]
    %v350 = vld [vmem:[%s5 + $0x78] sm:$0xff]
    %352 = vset.pattern.permute.xlu0 0
    %353 = vperm.xlu0 %352, %v335
    %v354 = vpop.permute.xlu0 %353
    %357 = vset.pattern.permute.xlu0 0
    %358 = vperm.xlu0 %357, %v336
    %v359 = vpop.permute.xlu0 %358
    %362 = vset.pattern.permute.xlu0 0
    %363 = vperm.xlu0 %362, %v337
    %v364 = vpop.permute.xlu0 %363
    %367 = vset.pattern.permute.xlu0 0
    %368 = vperm.xlu0 %367, %v338
    %v369 = vpop.permute.xlu0 %368
    %372 = vset.pattern.permute.xlu0 0
    %373 = vperm.xlu0 %372, %v339
    %v374 = vpop.permute.xlu0 %373
    %377 = vset.pattern.permute.xlu0 0
    %378 = vperm.xlu0 %377, %v340
    %v379 = vpop.permute.xlu0 %378
    %382 = vset.pattern.permute.xlu0 0
    %383 = vperm.xlu0 %382, %v341
    %v384 = vpop.permute.xlu0 %383
    %387 = vset.pattern.permute.xlu0 0
    %388 = vperm.xlu0 %387, %v342
    %v389 = vpop.permute.xlu0 %388
    %392 = vset.pattern.permute.xlu0 0
    %393 = vperm.xlu0 %392, %v343
    %v394 = vpop.permute.xlu0 %393
    %397 = vset.pattern.permute.xlu0 0
    %398 = vperm.xlu0 %397, %v344
    %v399 = vpop.permute.xlu0 %398
    %402 = vset.pattern.permute.xlu0 0
    %403 = vperm.xlu0 %402, %v345
    %v404 = vpop.permute.xlu0 %403
    %407 = vset.pattern.permute.xlu0 0
    %408 = vperm.xlu0 %407, %v346
    %v409 = vpop.permute.xlu0 %408
    %412 = vset.pattern.permute.xlu0 0
    %413 = vperm.xlu0 %412, %v347
    %v414 = vpop.permute.xlu0 %413
    %417 = vset.pattern.permute.xlu0 0
    %418 = vperm.xlu0 %417, %v348
    %v419 = vpop.permute.xlu0 %418
    %422 = vset.pattern.permute.xlu0 0
    %423 = vperm.xlu0 %422, %v349
    %v424 = vpop.permute.xlu0 %423
    %427 = vset.pattern.permute.xlu0 0
    %428 = vperm.xlu0 %427, %v350
    %v429 = vpop.permute.xlu0 %428
    %v447 = vunpack.c.l.b16 %v311
    %v448 = vunpack.c.l.b16 %v312
    %v449 = vunpack.c.l.b16 %v313
    %v450 = vunpack.c.l.b16 %v314
    %v451 = vunpack.c.l.b16 %v315
    %v452 = vunpack.c.l.b16 %v316
    %v453 = vunpack.c.l.b16 %v317
    %v454 = vunpack.c.l.b16 %v318
    %v455 = vunpack.c.l.b16 %v319
    %v456 = vunpack.c.l.b16 %v320
    %v457 = vunpack.c.l.b16 %v321
    %v458 = vunpack.c.l.b16 %v322
    %v459 = vunpack.c.l.b16 %v323
    %v460 = vunpack.c.l.b16 %v324
    %v461 = vunpack.c.l.b16 %v325
    %v462 = vunpack.c.l.b16 %v326
    %v463 = vpack.c.b16 %v448, %v447
    %v464 = vpack.c.b16 %v450, %v449
    %v465 = vpack.c.b16 %v452, %v451
    %v466 = vpack.c.b16 %v454, %v453
    %v467 = vpack.c.b16 %v456, %v455
    %v468 = vpack.c.b16 %v458, %v457
    %v469 = vpack.c.b16 %v460, %v459
    %v470 = vpack.c.b16 %v462, %v461
    %479 = vmatpush.bf16.msra.mxu0 %v334
    %480 = vmatpush.bf16.msra.mxu0 %v333
    %481 = vmatpush.bf16.msra.mxu0 %v332
    %482 = vmatpush.bf16.msra.mxu0 %v331
    %483 = vmatpush.bf16.msra.mxu0 %v330
    %484 = vmatpush.bf16.msra.mxu0 %v329
    %485 = vmatpush.bf16.msra.mxu0 %v328
    %486 = vmatpush.bf16.msra.mxu0 %v327
    %487 = vmatmul.bf16.gmra.mxu0 %v463
    %v488 = vpop.f32.mrf.mxu0
    %v489 = vadd.f32 %v354, %v488
    %v490 = vpop.f32.mrf.mxu0
    %v491 = vadd.f32 %v359, %v490
    %492 = vmatmul.bf16.gmra.mxu0 %v464
    %v493 = vpop.f32.mrf.mxu0
    %v494 = vadd.f32 %v364, %v493
    %v495 = vpop.f32.mrf.mxu0
    %v496 = vadd.f32 %v369, %v495
    %497 = vmatmul.bf16.gmra.mxu0 %v465
    %v498 = vpop.f32.mrf.mxu0
    %v499 = vadd.f32 %v374, %v498
    %v500 = vpop.f32.mrf.mxu0
    %v501 = vadd.f32 %v379, %v500
    %502 = vmatmul.bf16.gmra.mxu0 %v466
    %v503 = vpop.f32.mrf.mxu0
    %v504 = vadd.f32 %v384, %v503
    %v505 = vpop.f32.mrf.mxu0
    %v506 = vadd.f32 %v389, %v505
    %507 = vmatmul.bf16.gmra.mxu0 %v467
    %v508 = vpop.f32.mrf.mxu0
    %v509 = vadd.f32 %v394, %v508
    %v510 = vpop.f32.mrf.mxu0
    %v511 = vadd.f32 %v399, %v510
    %512 = vmatmul.bf16.gmra.mxu0 %v468
    %v513 = vpop.f32.mrf.mxu0
    %v514 = vadd.f32 %v404, %v513
    %v515 = vpop.f32.mrf.mxu0
    %v516 = vadd.f32 %v409, %v515
    %517 = vmatmul.bf16.gmra.mxu0 %v469
    %v518 = vpop.f32.mrf.mxu0
    %v519 = vadd.f32 %v414, %v518
    %v520 = vpop.f32.mrf.mxu0
    %v521 = vadd.f32 %v419, %v520
    %522 = vmatmul.bf16.gmra.mxu0 %v470
    %v523 = vpop.f32.mrf.mxu0
    %v524 = vadd.f32 %v424, %v523
    %v525 = vpop.f32.mrf.mxu0
    %v526 = vadd.f32 %v429, %v525
    %527 = vdwg.mxu0
    %v528 = vmax.f32 %v489, 0.0
    %v529 = vmax.f32 %v491, 0.0
    %v530 = vmax.f32 %v494, 0.0
    %v531 = vmax.f32 %v496, 0.0
    %v532 = vmax.f32 %v499, 0.0
    %v533 = vmax.f32 %v501, 0.0
    %v534 = vmax.f32 %v504, 0.0
    %v535 = vmax.f32 %v506, 0.0
    %v536 = vmax.f32 %v509, 0.0
    %v537 = vmax.f32 %v511, 0.0
    %v538 = vmax.f32 %v514, 0.0
    %v539 = vmax.f32 %v516, 0.0
    %v540 = vmax.f32 %v519, 0.0
    %v541 = vmax.f32 %v521, 0.0
    %v542 = vmax.f32 %v524, 0.0
    %v543 = vmax.f32 %v526, 0.0
    %v544 = vld [vmem:[%s6] sm:$0xf]
    %v545 = vld [vmem:[%s6 + $0x4] sm:$0xf]
    %v546 = vld [vmem:[%s6 + $0x8] sm:$0xf]
    %v547 = vld [vmem:[%s6 + $0xc] sm:$0xf]
    %v548 = vld [vmem:[%s6 + $0x10] sm:$0xf]
    %v549 = vld [vmem:[%s6 + $0x14] sm:$0xf]
    %v550 = vld [vmem:[%s6 + $0x18] sm:$0xf]
    %v551 = vld [vmem:[%s6 + $0x1c] sm:$0xf]
    %v552 = vld [vmem:[%s6 + $0x20] sm:$0xf]
    %v553 = vld [vmem:[%s6 + $0x24] sm:$0xf]
    %v554 = vld [vmem:[%s6 + $0x28] sm:$0xf]
    %v555 = vld [vmem:[%s6 + $0x2c] sm:$0xf]
    %v556 = vld [vmem:[%s6 + $0x30] sm:$0xf]
    %v557 = vld [vmem:[%s6 + $0x34] sm:$0xf]
    %v558 = vld [vmem:[%s6 + $0x38] sm:$0xf]
    %v559 = vld [vmem:[%s6 + $0x3c] sm:$0xf]
    %v560 = vpack.c.bf16 %v529, %v528
    %v561 = vpack.c.bf16 %v531, %v530
    %v562 = vpack.c.bf16 %v533, %v532
    %v563 = vpack.c.bf16 %v535, %v534
    %v564 = vpack.c.bf16 %v537, %v536
    %v565 = vpack.c.bf16 %v539, %v538
    %v566 = vpack.c.bf16 %v541, %v540
    %v567 = vpack.c.bf16 %v543, %v542
    %v568 = vld [vmem:[%s7] sm:$0xff]
    %v569 = vld [vmem:[%s7 + $0x8] sm:$0xff]
    %v570 = vld [vmem:[%s7 + $0x10] sm:$0xff]
    %v571 = vld [vmem:[%s7 + $0x18] sm:$0xff]
    %v572 = vld [vmem:[%s7 + $0x20] sm:$0xff]
    %v573 = vld [vmem:[%s7 + $0x28] sm:$0xff]
    %v574 = vld [vmem:[%s7 + $0x30] sm:$0xff]
    %v575 = vld [vmem:[%s7 + $0x38] sm:$0xff]
    %v576 = vld [vmem:[%s7 + $0x40] sm:$0xff]
    %v577 = vld [vmem:[%s7 + $0x48] sm:$0xff]
    %v578 = vld [vmem:[%s7 + $0x50] sm:$0xff]
    %v579 = vld [vmem:[%s7 + $0x58] sm:$0xff]
    %v580 = vld [vmem:[%s7 + $0x60] sm:$0xff]
    %v581 = vld [vmem:[%s7 + $0x68] sm:$0xff]
    %v582 = vld [vmem:[%s7 + $0x70] sm:$0xff]
    %v583 = vld [vmem:[%s7 + $0x78] sm:$0xff]
    %585 = vset.pattern.permute.xlu0 0
    %586 = vperm.xlu0 %585, %v568
    %v587 = vpop.permute.xlu0 %586
    %590 = vset.pattern.permute.xlu0 0
    %591 = vperm.xlu0 %590, %v569
    %v592 = vpop.permute.xlu0 %591
    %595 = vset.pattern.permute.xlu0 0
    %596 = vperm.xlu0 %595, %v570
    %v597 = vpop.permute.xlu0 %596
    %600 = vset.pattern.permute.xlu0 0
    %601 = vperm.xlu0 %600, %v571
    %v602 = vpop.permute.xlu0 %601
    %605 = vset.pattern.permute.xlu0 0
    %606 = vperm.xlu0 %605, %v572
    %v607 = vpop.permute.xlu0 %606
    %610 = vset.pattern.permute.xlu0 0
    %611 = vperm.xlu0 %610, %v573
    %v612 = vpop.permute.xlu0 %611
    %615 = vset.pattern.permute.xlu0 0
    %616 = vperm.xlu0 %615, %v574
    %v617 = vpop.permute.xlu0 %616
    %620 = vset.pattern.permute.xlu0 0
    %621 = vperm.xlu0 %620, %v575
    %v622 = vpop.permute.xlu0 %621
    %625 = vset.pattern.permute.xlu0 0
    %626 = vperm.xlu0 %625, %v576
    %v627 = vpop.permute.xlu0 %626
    %630 = vset.pattern.permute.xlu0 0
    %631 = vperm.xlu0 %630, %v577
    %v632 = vpop.permute.xlu0 %631
    %635 = vset.pattern.permute.xlu0 0
    %636 = vperm.xlu0 %635, %v578
    %v637 = vpop.permute.xlu0 %636
    %640 = vset.pattern.permute.xlu0 0
    %641 = vperm.xlu0 %640, %v579
    %v642 = vpop.permute.xlu0 %641
    %645 = vset.pattern.permute.xlu0 0
    %646 = vperm.xlu0 %645, %v580
    %v647 = vpop.permute.xlu0 %646
    %650 = vset.pattern.permute.xlu0 0
    %651 = vperm.xlu0 %650, %v581
    %v652 = vpop.permute.xlu0 %651
    %655 = vset.pattern.permute.xlu0 0
    %656 = vperm.xlu0 %655, %v582
    %v657 = vpop.permute.xlu0 %656
    %660 = vset.pattern.permute.xlu0 0
    %661 = vperm.xlu0 %660, %v583
    %v662 = vpop.permute.xlu0 %661
    %v680 = vunpack.c.l.b16 %v544
    %v681 = vunpack.c.l.b16 %v545
    %v682 = vunpack.c.l.b16 %v546
    %v683 = vunpack.c.l.b16 %v547
    %v684 = vunpack.c.l.b16 %v548
    %v685 = vunpack.c.l.b16 %v549
    %v686 = vunpack.c.l.b16 %v550
    %v687 = vunpack.c.l.b16 %v551
    %v688 = vunpack.c.l.b16 %v552
    %v689 = vunpack.c.l.b16 %v553
    %v690 = vunpack.c.l.b16 %v554
    %v691 = vunpack.c.l.b16 %v555
    %v692 = vunpack.c.l.b16 %v556
    %v693 = vunpack.c.l.b16 %v557
    %v694 = vunpack.c.l.b16 %v558
    %v695 = vunpack.c.l.b16 %v559
    %v696 = vpack.c.b16 %v681, %v680
    %v697 = vpack.c.b16 %v683, %v682
    %v698 = vpack.c.b16 %v685, %v684
    %v699 = vpack.c.b16 %v687, %v686
    %v700 = vpack.c.b16 %v689, %v688
    %v701 = vpack.c.b16 %v691, %v690
    %v702 = vpack.c.b16 %v693, %v692
    %v703 = vpack.c.b16 %v695, %v694
    %712 = vmatpush.bf16.msra.mxu0 %v567
    %713 = vmatpush.bf16.msra.mxu0 %v566
    %714 = vmatpush.bf16.msra.mxu0 %v565
    %715 = vmatpush.bf16.msra.mxu0 %v564
    %716 = vmatpush.bf16.msra.mxu0 %v563
    %717 = vmatpush.bf16.msra.mxu0 %v562
    %718 = vmatpush.bf16.msra.mxu0 %v561
    %719 = vmatpush.bf16.msra.mxu0 %v560
    %720 = vmatmul.bf16.gmra.mxu0 %v696
    %v721 = vpop.f32.mrf.mxu0
    %v722 = vadd.f32 %v587, %v721
    %v723 = vpop.f32.mrf.mxu0
    %v724 = vadd.f32 %v592, %v723
    %725 = vmatmul.bf16.gmra.mxu0 %v697
    %v726 = vpop.f32.mrf.mxu0
    %v727 = vadd.f32 %v597, %v726
    %v728 = vpop.f32.mrf.mxu0
    %v729 = vadd.f32 %v602, %v728
    %730 = vmatmul.bf16.gmra.mxu0 %v698
    %v731 = vpop.f32.mrf.mxu0
    %v732 = vadd.f32 %v607, %v731
    %v733 = vpop.f32.mrf.mxu0
    %v734 = vadd.f32 %v612, %v733
    %735 = vmatmul.bf16.gmra.mxu0 %v699
    %v736 = vpop.f32.mrf.mxu0
    %v737 = vadd.f32 %v617, %v736
    %v738 = vpop.f32.mrf.mxu0
    %v739 = vadd.f32 %v622, %v738
    %740 = vmatmul.bf16.gmra.mxu0 %v700
    %v741 = vpop.f32.mrf.mxu0
    %v742 = vadd.f32 %v627, %v741
    %v743 = vpop.f32.mrf.mxu0
    %v744 = vadd.f32 %v632, %v743
    %745 = vmatmul.bf16.gmra.mxu0 %v701
    %v746 = vpop.f32.mrf.mxu0
    %v747 = vadd.f32 %v637, %v746
    %v748 = vpop.f32.mrf.mxu0
    %v749 = vadd.f32 %v642, %v748
    %750 = vmatmul.bf16.gmra.mxu0 %v702
    %v751 = vpop.f32.mrf.mxu0
    %v752 = vadd.f32 %v647, %v751
    %v753 = vpop.f32.mrf.mxu0
    %v754 = vadd.f32 %v652, %v753
    %755 = vmatmul.bf16.gmra.mxu0 %v703
    %v756 = vpop.f32.mrf.mxu0
    %v757 = vadd.f32 %v657, %v756
    %v758 = vpop.f32.mrf.mxu0
    %v759 = vadd.f32 %v662, %v758
    %760 = vdwg.mxu0
    %v761 = vmax.f32 %v722, 0.0
    %v762 = vmax.f32 %v724, 0.0
    %v763 = vmax.f32 %v727, 0.0
    %v764 = vmax.f32 %v729, 0.0
    %v765 = vmax.f32 %v732, 0.0
    %v766 = vmax.f32 %v734, 0.0
    %v767 = vmax.f32 %v737, 0.0
    %v768 = vmax.f32 %v739, 0.0
    %v769 = vmax.f32 %v742, 0.0
    %v770 = vmax.f32 %v744, 0.0
    %v771 = vmax.f32 %v747, 0.0
    %v772 = vmax.f32 %v749, 0.0
    %v773 = vmax.f32 %v752, 0.0
    %v774 = vmax.f32 %v754, 0.0
    %v775 = vmax.f32 %v757, 0.0
    %v776 = vmax.f32 %v759, 0.0
    %v777 = vld [vmem:[%s8] sm:$0xf]
    %v778 = vld [vmem:[%s8 + $0x4] sm:$0xf]
    %v779 = vld [vmem:[%s8 + $0x8] sm:$0xf]
    %v780 = vld [vmem:[%s8 + $0xc] sm:$0xf]
    %v781 = vld [vmem:[%s8 + $0x10] sm:$0xf]
    %v782 = vld [vmem:[%s8 + $0x14] sm:$0xf]
    %v783 = vld [vmem:[%s8 + $0x18] sm:$0xf]
    %v784 = vld [vmem:[%s8 + $0x1c] sm:$0xf]
    %v785 = vld [vmem:[%s8 + $0x20] sm:$0xf]
    %v786 = vld [vmem:[%s8 + $0x24] sm:$0xf]
    %v787 = vld [vmem:[%s8 + $0x28] sm:$0xf]
    %v788 = vld [vmem:[%s8 + $0x2c] sm:$0xf]
    %v789 = vld [vmem:[%s8 + $0x30] sm:$0xf]
    %v790 = vld [vmem:[%s8 + $0x34] sm:$0xf]
    %v791 = vld [vmem:[%s8 + $0x38] sm:$0xf]
    %v792 = vld [vmem:[%s8 + $0x3c] sm:$0xf]
    %v793 = vpack.c.bf16 %v762, %v761
    %v794 = vpack.c.bf16 %v764, %v763
    %v795 = vpack.c.bf16 %v766, %v765
    %v796 = vpack.c.bf16 %v768, %v767
    %v797 = vpack.c.bf16 %v770, %v769
    %v798 = vpack.c.bf16 %v772, %v771
    %v799 = vpack.c.bf16 %v774, %v773
    %v800 = vpack.c.bf16 %v776, %v775
    %v801 = vld [vmem:[%s9] sm:$0xf]
    %v802 = vld [vmem:[%s9 + $0x4] sm:$0xf]
    %v803 = vld [vmem:[%s9 + $0x8] sm:$0xf]
    %v804 = vld [vmem:[%s9 + $0xc] sm:$0xf]
    %v805 = vld [vmem:[%s9 + $0x10] sm:$0xf]
    %v806 = vld [vmem:[%s9 + $0x14] sm:$0xf]
    %v807 = vld [vmem:[%s9 + $0x18] sm:$0xf]
    %v808 = vld [vmem:[%s9 + $0x1c] sm:$0xf]
    %v809 = vld [vmem:[%s9 + $0x20] sm:$0xf]
    %v810 = vld [vmem:[%s9 + $0x24] sm:$0xf]
    %v811 = vld [vmem:[%s9 + $0x28] sm:$0xf]
    %v812 = vld [vmem:[%s9 + $0x2c] sm:$0xf]
    %v813 = vld [vmem:[%s9 + $0x30] sm:$0xf]
    %v814 = vld [vmem:[%s9 + $0x34] sm:$0xf]
    %v815 = vld [vmem:[%s9 + $0x38] sm:$0xf]
    %v816 = vld [vmem:[%s9 + $0x3c] sm:$0xf]
    %v817 = vpack.c.bf16 %v62, %v61
    %v818 = vpack.c.bf16 %v63, %v63
    %v835 = vunpack.c.l.b16 %v801
    %v836 = vunpack.c.l.b16 %v802
    %v837 = vunpack.c.l.b16 %v803
    %v838 = vunpack.c.l.b16 %v804
    %v839 = vunpack.c.l.b16 %v805
    %v840 = vunpack.c.l.b16 %v806
    %v841 = vunpack.c.l.b16 %v807
    %v842 = vunpack.c.l.b16 %v808
    %v843 = vunpack.c.l.b16 %v809
    %v844 = vunpack.c.l.b16 %v810
    %v845 = vunpack.c.l.b16 %v811
    %v846 = vunpack.c.l.b16 %v812
    %v847 = vunpack.c.l.b16 %v813
    %v848 = vunpack.c.l.b16 %v814
    %v849 = vunpack.c.l.b16 %v815
    %v850 = vunpack.c.l.b16 %v816
    %v851 = vpack.c.b16 %v836, %v835
    %v852 = vpack.c.b16 %v838, %v837
    %v853 = vpack.c.b16 %v840, %v839
    %v854 = vpack.c.b16 %v842, %v841
    %v855 = vpack.c.b16 %v844, %v843
    %v856 = vpack.c.b16 %v846, %v845
    %v857 = vpack.c.b16 %v848, %v847
    %v858 = vpack.c.b16 %v850, %v849
    %vm859 = vcmask 195584
    %v861 = vsel %vm859, %v851, 0
    %v864 = vsel %vm859, %v852, 0
    %v867 = vsel %vm859, %v853, 0
    %v870 = vsel %vm859, %v854, 0
    %v873 = vsel %vm859, %v855, 0
    %v876 = vsel %vm859, %v856, 0
    %v879 = vsel %vm859, %v857, 0
    %v882 = vsel %vm859, %v858, 0
    %v885 = vsel %vm242, %v818, 0
    %887 = vmatpush.bf16.msra.mxu0 0
    %888 = vmatpush.bf16.msra.mxu0 0
    %889 = vmatpush.bf16.msra.mxu0 0
    %890 = vmatpush.bf16.msra.mxu0 0
    %891 = vmatpush.bf16.msra.mxu0 0
    %892 = vmatpush.bf16.msra.mxu0 0
    %893 = vmatpush.bf16.msra.mxu0 %v885
    %894 = vmatpush.bf16.msra.mxu0 %v817
    %895 = vmatmul.bf16.gmra.mxu0 %v861
    %v896 = vpop.f32.mrf.mxu0
    %v897 = vadd.f32 0.0, %v896
    %v898 = vpop.f32.mrf.mxu0
    %v899 = vadd.f32 0.0, %v898
    %900 = vmatmul.bf16.gmra.mxu0 %v864
    %v901 = vpop.f32.mrf.mxu0
    %v902 = vadd.f32 0.0, %v901
    %v903 = vpop.f32.mrf.mxu0
    %v904 = vadd.f32 0.0, %v903
    %905 = vmatmul.bf16.gmra.mxu0 %v867
    %v906 = vpop.f32.mrf.mxu0
    %v907 = vadd.f32 0.0, %v906
    %v908 = vpop.f32.mrf.mxu0
    %v909 = vadd.f32 0.0, %v908
    %910 = vmatmul.bf16.gmra.mxu0 %v870
    %v911 = vpop.f32.mrf.mxu0
    %v912 = vadd.f32 0.0, %v911
    %v913 = vpop.f32.mrf.mxu0
    %v914 = vadd.f32 0.0, %v913
    %915 = vmatmul.bf16.gmra.mxu0 %v873
    %v916 = vpop.f32.mrf.mxu0
    %v917 = vadd.f32 0.0, %v916
    %v918 = vpop.f32.mrf.mxu0
    %v919 = vadd.f32 0.0, %v918
    %920 = vmatmul.bf16.gmra.mxu0 %v876
    %v921 = vpop.f32.mrf.mxu0
    %v922 = vadd.f32 0.0, %v921
    %v923 = vpop.f32.mrf.mxu0
    %v924 = vadd.f32 0.0, %v923
    %925 = vmatmul.bf16.gmra.mxu0 %v879
    %v926 = vpop.f32.mrf.mxu0
    %v927 = vadd.f32 0.0, %v926
    %v928 = vpop.f32.mrf.mxu0
    %v929 = vadd.f32 0.0, %v928
    %930 = vmatmul.bf16.gmra.mxu0 %v882
    %v931 = vpop.f32.mrf.mxu0
    %v932 = vadd.f32 0.0, %v931
    %v933 = vpop.f32.mrf.mxu0
    %v934 = vadd.f32 0.0, %v933
    %935 = vdwg.mxu0
    %v952 = vunpack.c.l.b16 %v777
    %v953 = vunpack.c.l.b16 %v778
    %v954 = vunpack.c.l.b16 %v779
    %v955 = vunpack.c.l.b16 %v780
    %v956 = vunpack.c.l.b16 %v781
    %v957 = vunpack.c.l.b16 %v782
    %v958 = vunpack.c.l.b16 %v783
    %v959 = vunpack.c.l.b16 %v784
    %v960 = vunpack.c.l.b16 %v785
    %v961 = vunpack.c.l.b16 %v786
    %v962 = vunpack.c.l.b16 %v787
    %v963 = vunpack.c.l.b16 %v788
    %v964 = vunpack.c.l.b16 %v789
    %v965 = vunpack.c.l.b16 %v790
    %v966 = vunpack.c.l.b16 %v791
    %v967 = vunpack.c.l.b16 %v792
    %v968 = vpack.c.b16 %v953, %v952
    %v969 = vpack.c.b16 %v955, %v954
    %v970 = vpack.c.b16 %v957, %v956
    %v971 = vpack.c.b16 %v959, %v958
    %v972 = vpack.c.b16 %v961, %v960
    %v973 = vpack.c.b16 %v963, %v962
    %v974 = vpack.c.b16 %v965, %v964
    %v975 = vpack.c.b16 %v967, %v966
    %984 = vmatpush.bf16.msra.mxu0 %v800
    %985 = vmatpush.bf16.msra.mxu0 %v799
    %986 = vmatpush.bf16.msra.mxu0 %v798
    %987 = vmatpush.bf16.msra.mxu0 %v797
    %988 = vmatpush.bf16.msra.mxu0 %v796
    %989 = vmatpush.bf16.msra.mxu0 %v795
    %990 = vmatpush.bf16.msra.mxu0 %v794
    %991 = vmatpush.bf16.msra.mxu0 %v793
    %992 = vmatmul.bf16.gmra.mxu0 %v968
    %v993 = vpop.f32.mrf.mxu0
    %v994 = vadd.f32 %v897, %v993
    %v995 = vpop.f32.mrf.mxu0
    %v996 = vadd.f32 %v899, %v995
    %997 = vmatmul.bf16.gmra.mxu0 %v969
    %v998 = vpop.f32.mrf.mxu0
    %v999 = vadd.f32 %v902, %v998
    %v1000 = vpop.f32.mrf.mxu0
    %v1001 = vadd.f32 %v904, %v1000
    %1002 = vmatmul.bf16.gmra.mxu0 %v970
    %v1003 = vpop.f32.mrf.mxu0
    %v1004 = vadd.f32 %v907, %v1003
    %v1005 = vpop.f32.mrf.mxu0
    %v1006 = vadd.f32 %v909, %v1005
    %1007 = vmatmul.bf16.gmra.mxu0 %v971
    %v1008 = vpop.f32.mrf.mxu0
    %v1009 = vadd.f32 %v912, %v1008
    %v1010 = vpop.f32.mrf.mxu0
    %v1011 = vadd.f32 %v914, %v1010
    %1012 = vmatmul.bf16.gmra.mxu0 %v972
    %v1013 = vpop.f32.mrf.mxu0
    %v1014 = vadd.f32 %v917, %v1013
    %v1015 = vpop.f32.mrf.mxu0
    %v1016 = vadd.f32 %v919, %v1015
    %1017 = vmatmul.bf16.gmra.mxu0 %v973
    %v1018 = vpop.f32.mrf.mxu0
    %v1019 = vadd.f32 %v922, %v1018
    %v1020 = vpop.f32.mrf.mxu0
    %v1021 = vadd.f32 %v924, %v1020
    %1022 = vmatmul.bf16.gmra.mxu0 %v974
    %v1023 = vpop.f32.mrf.mxu0
    %v1024 = vadd.f32 %v927, %v1023
    %v1025 = vpop.f32.mrf.mxu0
    %v1026 = vadd.f32 %v929, %v1025
    %1027 = vmatmul.bf16.gmra.mxu0 %v975
    %v1028 = vpop.f32.mrf.mxu0
    %v1029 = vadd.f32 %v932, %v1028
    %v1030 = vpop.f32.mrf.mxu0
    %v1031 = vadd.f32 %v934, %v1030
    %1032 = vdwg.mxu0
    %v1033 = vld [vmem:[%s10] sm:$0xff]
    %v1034 = vld [vmem:[%s10 + $0x8] sm:$0xff]
    %v1035 = vld [vmem:[%s10 + $0x10] sm:$0xff]
    %v1036 = vld [vmem:[%s10 + $0x18] sm:$0xff]
    %v1037 = vld [vmem:[%s10 + $0x20] sm:$0xff]
    %v1038 = vld [vmem:[%s10 + $0x28] sm:$0xff]
    %v1039 = vld [vmem:[%s10 + $0x30] sm:$0xff]
    %v1040 = vld [vmem:[%s10 + $0x38] sm:$0xff]
    %v1041 = vld [vmem:[%s10 + $0x40] sm:$0xff]
    %v1042 = vld [vmem:[%s10 + $0x48] sm:$0xff]
    %v1043 = vld [vmem:[%s10 + $0x50] sm:$0xff]
    %v1044 = vld [vmem:[%s10 + $0x58] sm:$0xff]
    %v1045 = vld [vmem:[%s10 + $0x60] sm:$0xff]
    %v1046 = vld [vmem:[%s10 + $0x68] sm:$0xff]
    %v1047 = vld [vmem:[%s10 + $0x70] sm:$0xff]
    %v1048 = vld [vmem:[%s10 + $0x78] sm:$0xff]
    %1050 = vset.pattern.permute.xlu0 0
    %1051 = vperm.xlu0 %1050, %v1033
    %v1052 = vpop.permute.xlu0 %1051
    %1055 = vset.pattern.permute.xlu0 0
    %1056 = vperm.xlu0 %1055, %v1034
    %v1057 = vpop.permute.xlu0 %1056
    %1060 = vset.pattern.permute.xlu0 0
    %1061 = vperm.xlu0 %1060, %v1035
    %v1062 = vpop.permute.xlu0 %1061
    %1065 = vset.pattern.permute.xlu0 0
    %1066 = vperm.xlu0 %1065, %v1036
    %v1067 = vpop.permute.xlu0 %1066
    %1070 = vset.pattern.permute.xlu0 0
    %1071 = vperm.xlu0 %1070, %v1037
    %v1072 = vpop.permute.xlu0 %1071
    %1075 = vset.pattern.permute.xlu0 0
    %1076 = vperm.xlu0 %1075, %v1038
    %v1077 = vpop.permute.xlu0 %1076
    %1080 = vset.pattern.permute.xlu0 0
    %1081 = vperm.xlu0 %1080, %v1039
    %v1082 = vpop.permute.xlu0 %1081
    %1085 = vset.pattern.permute.xlu0 0
    %1086 = vperm.xlu0 %1085, %v1040
    %v1087 = vpop.permute.xlu0 %1086
    %1090 = vset.pattern.permute.xlu0 0
    %1091 = vperm.xlu0 %1090, %v1041
    %v1092 = vpop.permute.xlu0 %1091
    %1095 = vset.pattern.permute.xlu0 0
    %1096 = vperm.xlu0 %1095, %v1042
    %v1097 = vpop.permute.xlu0 %1096
    %1100 = vset.pattern.permute.xlu0 0
    %1101 = vperm.xlu0 %1100, %v1043
    %v1102 = vpop.permute.xlu0 %1101
    %1105 = vset.pattern.permute.xlu0 0
    %1106 = vperm.xlu0 %1105, %v1044
    %v1107 = vpop.permute.xlu0 %1106
    %1110 = vset.pattern.permute.xlu0 0
    %1111 = vperm.xlu0 %1110, %v1045
    %v1112 = vpop.permute.xlu0 %1111
    %1115 = vset.pattern.permute.xlu0 0
    %1116 = vperm.xlu0 %1115, %v1046
    %v1117 = vpop.permute.xlu0 %1116
    %1120 = vset.pattern.permute.xlu0 0
    %1121 = vperm.xlu0 %1120, %v1047
    %v1122 = vpop.permute.xlu0 %1121
    %1125 = vset.pattern.permute.xlu0 0
    %1126 = vperm.xlu0 %1125, %v1048
    %v1127 = vpop.permute.xlu0 %1126
    %v1129 = vadd.f32 %v994, %v1052
    %v1130 = vadd.f32 %v996, %v1057
    %v1131 = vadd.f32 %v999, %v1062
    %v1132 = vadd.f32 %v1001, %v1067
    %v1133 = vadd.f32 %v1004, %v1072
    %v1134 = vadd.f32 %v1006, %v1077
    %v1135 = vadd.f32 %v1009, %v1082
    %v1136 = vadd.f32 %v1011, %v1087
    %v1137 = vadd.f32 %v1014, %v1092
    %v1138 = vadd.f32 %v1016, %v1097
    %v1139 = vadd.f32 %v1019, %v1102
    %v1140 = vadd.f32 %v1021, %v1107
    %v1141 = vadd.f32 %v1024, %v1112
    %v1142 = vadd.f32 %v1026, %v1117
    %v1143 = vadd.f32 %v1029, %v1122
    %v1144 = vadd.f32 %v1031, %v1127
    %v1145 = vmax.f32 %v1129, 0.0
    %v1146 = vmax.f32 %v1130, 0.0
    %v1147 = vmax.f32 %v1131, 0.0
    %v1148 = vmax.f32 %v1132, 0.0
    %v1149 = vmax.f32 %v1133, 0.0
    %v1150 = vmax.f32 %v1134, 0.0
    %v1151 = vmax.f32 %v1135, 0.0
    %v1152 = vmax.f32 %v1136, 0.0
    %v1153 = vmax.f32 %v1137, 0.0
    %v1154 = vmax.f32 %v1138, 0.0
    %v1155 = vmax.f32 %v1139, 0.0
    %v1156 = vmax.f32 %v1140, 0.0
    %v1157 = vmax.f32 %v1141, 0.0
    %v1158 = vmax.f32 %v1142, 0.0
    %v1159 = vmax.f32 %v1143, 0.0
    %v1160 = vmax.f32 %v1144, 0.0
    %v1161 = vld [vmem:[%s11] sm:$0xf]
    %v1162 = vld [vmem:[%s11 + $0x4] sm:$0xf]
    %v1163 = vld [vmem:[%s11 + $0x8] sm:$0xf]
    %v1164 = vld [vmem:[%s11 + $0xc] sm:$0xf]
    %v1165 = vld [vmem:[%s11 + $0x10] sm:$0xf]
    %v1166 = vld [vmem:[%s11 + $0x14] sm:$0xf]
    %v1167 = vld [vmem:[%s11 + $0x18] sm:$0xf]
    %v1168 = vld [vmem:[%s11 + $0x1c] sm:$0xf]
    %v1169 = vpack.c.bf16 %v1146, %v1145
    %v1170 = vpack.c.bf16 %v1148, %v1147
    %v1171 = vpack.c.bf16 %v1150, %v1149
    %v1172 = vpack.c.bf16 %v1152, %v1151
    %v1173 = vpack.c.bf16 %v1154, %v1153
    %v1174 = vpack.c.bf16 %v1156, %v1155
    %v1175 = vpack.c.bf16 %v1158, %v1157
    %v1176 = vpack.c.bf16 %v1160, %v1159
    %v1177 = vld [vmem:[%s12] sm:$0xff]
    %v1178 = vld [vmem:[%s12 + $0x8] sm:$0xff]
    %v1179 = vld [vmem:[%s12 + $0x10] sm:$0xff]
    %v1180 = vld [vmem:[%s12 + $0x18] sm:$0xff]
    %v1181 = vld [vmem:[%s12 + $0x20] sm:$0xff]
    %v1182 = vld [vmem:[%s12 + $0x28] sm:$0xff]
    %v1183 = vld [vmem:[%s12 + $0x30] sm:$0xff]
    %v1184 = vld [vmem:[%s12 + $0x38] sm:$0xff]
    %1186 = vset.pattern.permute.xlu0 0
    %1187 = vperm.xlu0 %1186, %v1177
    %v1188 = vpop.permute.xlu0 %1187
    %1191 = vset.pattern.permute.xlu0 0
    %1192 = vperm.xlu0 %1191, %v1178
    %v1193 = vpop.permute.xlu0 %1192
    %1196 = vset.pattern.permute.xlu0 0
    %1197 = vperm.xlu0 %1196, %v1179
    %v1198 = vpop.permute.xlu0 %1197
    %1201 = vset.pattern.permute.xlu0 0
    %1202 = vperm.xlu0 %1201, %v1180
    %v1203 = vpop.permute.xlu0 %1202
    %1206 = vset.pattern.permute.xlu0 0
    %1207 = vperm.xlu0 %1206, %v1181
    %v1208 = vpop.permute.xlu0 %1207
    %1211 = vset.pattern.permute.xlu0 0
    %1212 = vperm.xlu0 %1211, %v1182
    %v1213 = vpop.permute.xlu0 %1212
    %1216 = vset.pattern.permute.xlu0 0
    %1217 = vperm.xlu0 %1216, %v1183
    %v1218 = vpop.permute.xlu0 %1217
    %1221 = vset.pattern.permute.xlu0 0
    %1222 = vperm.xlu0 %1221, %v1184
    %v1223 = vpop.permute.xlu0 %1222
    %v1233 = vunpack.c.l.b16 %v1161
    %v1234 = vunpack.c.l.b16 %v1162
    %v1235 = vunpack.c.l.b16 %v1163
    %v1236 = vunpack.c.l.b16 %v1164
    %v1237 = vunpack.c.l.b16 %v1165
    %v1238 = vunpack.c.l.b16 %v1166
    %v1239 = vunpack.c.l.b16 %v1167
    %v1240 = vunpack.c.l.b16 %v1168
    %v1241 = vpack.c.b16 %v1234, %v1233
    %v1242 = vpack.c.b16 %v1236, %v1235
    %v1243 = vpack.c.b16 %v1238, %v1237
    %v1244 = vpack.c.b16 %v1240, %v1239
    %1249 = vmatpush.bf16.msra.mxu0 %v1176
    %1250 = vmatpush.bf16.msra.mxu0 %v1175
    %1251 = vmatpush.bf16.msra.mxu0 %v1174
    %1252 = vmatpush.bf16.msra.mxu0 %v1173
    %1253 = vmatpush.bf16.msra.mxu0 %v1172
    %1254 = vmatpush.bf16.msra.mxu0 %v1171
    %1255 = vmatpush.bf16.msra.mxu0 %v1170
    %1256 = vmatpush.bf16.msra.mxu0 %v1169
    %1257 = vmatmul.bf16.gmra.mxu0 %v1241
    %v1258 = vpop.f32.mrf.mxu0
    %v1259 = vadd.f32 %v1188, %v1258
    %v1260 = vpop.f32.mrf.mxu0
    %v1261 = vadd.f32 %v1193, %v1260
    %1262 = vmatmul.bf16.gmra.mxu0 %v1242
    %v1263 = vpop.f32.mrf.mxu0
    %v1264 = vadd.f32 %v1198, %v1263
    %v1265 = vpop.f32.mrf.mxu0
    %v1266 = vadd.f32 %v1203, %v1265
    %1267 = vmatmul.bf16.gmra.mxu0 %v1243
    %v1268 = vpop.f32.mrf.mxu0
    %v1269 = vadd.f32 %v1208, %v1268
    %v1270 = vpop.f32.mrf.mxu0
    %v1271 = vadd.f32 %v1213, %v1270
    %1272 = vmatmul.bf16.gmra.mxu0 %v1244
    %v1273 = vpop.f32.mrf.mxu0
    %v1274 = vadd.f32 %v1218, %v1273
    %v1275 = vpop.f32.mrf.mxu0
    %v1276 = vadd.f32 %v1223, %v1275
    %1277 = vdwg.mxu0
    %v1278 = vmax.f32 %v1259, 0.0
    %v1279 = vmax.f32 %v1261, 0.0
    %v1280 = vmax.f32 %v1264, 0.0
    %v1281 = vmax.f32 %v1266, 0.0
    %v1282 = vmax.f32 %v1269, 0.0
    %v1283 = vmax.f32 %v1271, 0.0
    %v1284 = vmax.f32 %v1274, 0.0
    %v1285 = vmax.f32 %v1276, 0.0
    %v1286 = vld [vmem:[%s13] sm:$0xf]
    %v1287 = vld [vmem:[%s13 + $0x4] sm:$0xf]
    %v1288 = vld [vmem:[%s13 + $0x8] sm:$0xf]
    %v1289 = vld [vmem:[%s13 + $0xc] sm:$0xf]
    %v1290 = vpack.c.bf16 %v1279, %v1278
    %v1291 = vpack.c.bf16 %v1281, %v1280
    %v1292 = vpack.c.bf16 %v1283, %v1282
    %v1293 = vpack.c.bf16 %v1285, %v1284
    %v1294 = vld [vmem:[%s14] sm:$0xff]
    %v1295 = vld [vmem:[%s14 + $0x8] sm:$0xff]
    %v1296 = vld [vmem:[%s14 + $0x10] sm:$0xff]
    %v1297 = vld [vmem:[%s14 + $0x18] sm:$0xff]
    %1299 = vset.pattern.permute.xlu0 0
    %1300 = vperm.xlu0 %1299, %v1294
    %v1301 = vpop.permute.xlu0 %1300
    %1304 = vset.pattern.permute.xlu0 0
    %1305 = vperm.xlu0 %1304, %v1295
    %v1306 = vpop.permute.xlu0 %1305
    %1309 = vset.pattern.permute.xlu0 0
    %1310 = vperm.xlu0 %1309, %v1296
    %v1311 = vpop.permute.xlu0 %1310
    %1314 = vset.pattern.permute.xlu0 0
    %1315 = vperm.xlu0 %1314, %v1297
    %v1316 = vpop.permute.xlu0 %1315
    %v1322 = vunpack.c.l.b16 %v1286
    %v1323 = vunpack.c.l.b16 %v1287
    %v1324 = vunpack.c.l.b16 %v1288
    %v1325 = vunpack.c.l.b16 %v1289
    %v1326 = vpack.c.b16 %v1323, %v1322
    %v1327 = vpack.c.b16 %v1325, %v1324
    %vm1328 = vcmask 523264
    %v1330 = vsel %vm1328, %v1326, 0
    %v1333 = vsel %vm1328, %v1327, 0
    %1335 = vmatpush.bf16.msra.mxu0 0
    %1336 = vmatpush.bf16.msra.mxu0 0
    %1337 = vmatpush.bf16.msra.mxu0 0
    %1338 = vmatpush.bf16.msra.mxu0 0
    %1339 = vmatpush.bf16.msra.mxu0 %v1293
    %1340 = vmatpush.bf16.msra.mxu0 %v1292
    %1341 = vmatpush.bf16.msra.mxu0 %v1291
    %1342 = vmatpush.bf16.msra.mxu0 %v1290
    %1343 = vmatmul.bf16.gmra.mxu0 %v1330
    %v1344 = vpop.f32.mrf.mxu0
    %v1345 = vadd.f32 %v1301, %v1344
    %v1346 = vpop.f32.mrf.mxu0
    %v1347 = vadd.f32 %v1306, %v1346
    %1348 = vmatmul.bf16.gmra.mxu0 %v1333
    %v1349 = vpop.f32.mrf.mxu0
    %v1350 = vadd.f32 %v1311, %v1349
    %v1351 = vpop.f32.mrf.mxu0
    %v1352 = vadd.f32 %v1316, %v1351
    %1353 = vdwg.mxu0
    %v1354 = vmax.f32 %v1345, 0.0
    %v1355 = vmax.f32 %v1347, 0.0
    %v1356 = vmax.f32 %v1350, 0.0
    %v1357 = vmax.f32 %v1352, 0.0
    %v1358 = vld [vmem:[%s15] sm:$0x1]
    %v1359 = vld [vmem:[#allocation2] sm:$0x1]
    %1361 = vset.pattern.permute.xlu0 0
    %1362 = vperm.xlu0 %1361, %v1359
    %v1363 = vpop.permute.xlu0 %1362
    %v1365 = vperm.slane %v1363, 0
    %vm1366 = vcmask 261120
    %v1368 = vsel %vm1366, %v1358, 0
    %1370 = vmatpush.msra.mxu0 0.0
    %1371 = vmatpush.msra.mxu0 0.0
    %1372 = vmatpush.msra.mxu0 0.0
    %1373 = vmatpush.msra.mxu0 0.0
    %1374 = vmatpush.msra.mxu0 0.0
    %1375 = vmatpush.msra.mxu0 0.0
    %1376 = vmatpush.msra.mxu0 0.0
    %1377 = vmatpush.msra.mxu0 0.0
    %1378 = vmatpush.msra.mxu0 0.0
    %1379 = vmatpush.msra.mxu0 0.0
    %1380 = vmatpush.msra.mxu0 0.0
    %1381 = vmatpush.msra.mxu0 0.0
    %1382 = vmatpush.msra.mxu0 %v1357
    %1383 = vmatpush.msra.mxu0 %v1356
    %1384 = vmatpush.msra.mxu0 %v1355
    %1385 = vmatpush.msra.mxu0 %v1354
    %1386 = vmatmul.f32.gmra.mxu0 %v1368
    %v1387 = vpop.f32.mrf.mxu0
    %v1388 = vadd.f32 %v1365, %v1387
    %1389 = vdwg.mxu0
    %v1390 = vxor.u32 %v1388, 2147483648
    %v1391 = vmul.f32 %v1390, 1.442695
    %v1392 = vpow.pop %v1391
    %v1393 = vadd.f32 %v1392, 1.0
    %v1394 = vrcp.pop %v1393
    %v1395 = vmul.f32 %v1393, %v1394
    %v1396 = vsub.f32 1.0, %v1395
    %v1397 = vmul.f32 %v1394, %v1396
    %v1398 = vadd.f32 %v1394, %v1397
    %vm1399 = vweird.f32 %v1393
    %vm1400 = vweird.f32 %v1394
    %vm1401 = vmor %vm1399, %vm1400
    %v1402 = vsel %vm1401, %v1394, %v1398
    %v1403 = vand.u32 2147483647, %v1393
    %vm1404 = vcmp.eq.f32.partialorder %v1403, 8.507059e+37
    %v1405 = vand.u32 %v1393, 2147483648
    %v1406 = vor.u32 1.1754944e-38, %v1405
    %v1407 = vsel %vm1404, %v1406, %v1402
    %v1408 = vmul.f32 1.0, %v1407
    %1409 = vst [vmem:[#allocation3] sm:$0x1] %v1408
    // Predicated region
    $region70: #{tpu_custom_call.1} parent=1 // pred_check
      _
    $region71: #{tpu_custom_call.1} parent=1 // pred_check_branch
      %1411 = sbr.rel (0) target = $region73
    $region72: #{tpu_custom_call.1} parent=1 // pred_region
      %1413 = vsyncadd [#allocation4], 0
      %s1415 = sshll.u32 [#allocation3], 4
      %s1416 = int_to_ptr.vmem [resolvable:$true] %s1415
      %s1417 = sshll.u32 %s17, 4
      %s1418 = int_to_ptr.hbm [resolvable:$true] %s1417
      %1420 = dma.vmem_to_hbm [thread:$0]  %s1416, 16, %s1418, [#allocation4]
    $region73: #{tpu_custom_call.1} parent=1 // pred_fallthru
      _
    // Predicated region
    $region74: #{tpu_custom_call.1} parent=1 // pred_check
      _
    $region75: #{tpu_custom_call.1} parent=1 // pred_check_branch
      %1422 = sbr.rel (0) target = $region77
    $region76: #{tpu_custom_call.1} parent=1 // pred_region
      %1424 = dma.done [#allocation4], 16
    $region77: #{tpu_custom_call.1} parent=1 // pred_fallthru
      _
    %1425 = vsyncpa [#allocation4], 1

</llo_original>
